<compile_context>
chip_gen: v7x
topology: tpu7x:2x2x1
jax: 0.10.0
libtpu: 0.0.40
codegen_flags: <defaults>
</compile_context>

<pallas_src>
import functools

import jax
import jax.numpy as jnp
from jax import lax
from jax.experimental import pallas as pl
from jax.experimental.pallas import tpu as pltpu

EMB_DIMS = 32                                  # emb_dims (small for the test)
LAYER_DIMS = [(3, 64), (64, 64), (64, 64), (64, 128), (128, EMB_DIMS)]
BN_EPS = 1e-5
BN_MOMENTUM = 0.1

C_PAD = 128                      # lane-dense channel padding for every layer
K_PAD = [8, 128, 128, 128, 128]  # per-layer padded input-channel rows in slab
K_OFF = [0, 8, 136, 264, 392]    # row offsets of each layer inside the slab
K_TOTAL = 520
TARGET_ROWS = 256                # rows (points) per grid step to fill the MXU


# ----------------------------- Pallas kernel --------------------------------
def _pointnet_kernel(x_ref, w_ref, b_ref, o_ref, *, G, N):
    # x_ref: (G*N, 8)        channel-padded, pre-transformed points (G clouds)
    # w_ref: (K_TOTAL, 128)  packed folded (1x1-conv x BN-eval) weights
    # b_ref: (8, 128)        packed folded biases (rows 0..4 used)
    # o_ref: (G, 128)        per-cloud max-pooled features (cols >= EMB_DIMS = 0)
    h = x_ref[...]                                        # (G*N, 8)
    for li in range(len(K_OFF)):
        w = w_ref[K_OFF[li]:K_OFF[li] + K_PAD[li], :]     # static, 8-aligned slice
        b = b_ref[li:li + 1, :]                           # (1, 128)
        h = jnp.maximum(
            jnp.dot(h, w, preferred_element_type=jnp.float32) + b, 0.0)
    # symfn_max: max-pool over the points axis, per cloud.
    o_ref[...] = jnp.max(h.reshape(G, N, C_PAD), axis=1)


def _group_size(N):
    g = -(-TARGET_ROWS // N)          # ceil(TARGET_ROWS / N)
    return ((g + 7) // 8) * 8         # multiple of 8 for an aligned out block


def pointnet_features(points, transforms, w_slab, b_slab):
    """points: [M, N, 3]; transforms: [M, 4, 4]; returns features [M, emb]."""
    M, N, _ = points.shape
    # Rigid transform folded out of the kernel (tiny XLA einsum).
    xt = se3_transform(transforms, points)                # [M, N, 3]
    G = _group_size(N)
    M_pad = ((M + G - 1) // G) * G
    # Pad clouds to a multiple of G and channels 3 -> 8 (zero padding).
    x = jnp.pad(xt, ((0, M_pad - M), (0, 0), (0, 5)))     # [M_pad, N, 8]
    x2d = x.reshape(M_pad * N, 8)
    R = G * N

    out = pl.pallas_call(
        functools.partial(_pointnet_kernel, G=G, N=N),
        out_shape=jax.ShapeDtypeStruct((M_pad, C_PAD), jnp.float32),
        grid_spec=pltpu.PrefetchScalarGridSpec(
            num_scalar_prefetch=0,
            grid=(M_pad // G,),
            in_specs=[
                pl.BlockSpec((R, 8), lambda i: (i, 0)),
                pl.BlockSpec((K_TOTAL, C_PAD), lambda i: (0, 0)),
                pl.BlockSpec((8, C_PAD), lambda i: (0, 0)),
            ],
            out_specs=pl.BlockSpec((G, C_PAD), lambda i: (i, 0)),
        ),
        compiler_params=pltpu.CompilerParams(
            dimension_semantics=("parallel",)),
    )(x2d, w_slab, b_slab)
    return out[:M, :EMB_DIMS]


# ----------------------------- parameters / BN ------------------------------
def init_pointnet_params(key):
    ws, bs = [], []
    for cin, cout in LAYER_DIMS:
        key, k1, k2 = jax.random.split(key, 3)
        bound = 1.0 / (cin ** 0.5)
        ws.append(jax.random.uniform(k1, (cin, cout), jnp.float32, -bound, bound))
        bs.append(jax.random.uniform(k2, (cout,), jnp.float32, -bound, bound))
    return ws, bs


def bn_stats_after_handle_batchnorm(template, source, ws, bs):
    # Replicates PointNetLK.handle_batchNorm: the (training-mode) net sees the
    # template and source once, updating BN running stats, then switches to eval.
    rms = [jnp.zeros((c,), jnp.float32) for _, c in LAYER_DIMS]
    rvs = [jnp.ones((c,), jnp.float32) for _, c in LAYER_DIMS]
    for pts in (template, source):
        x = pts                                      # [B, N, 3]
        for li in range(len(LAYER_DIMS)):
            y = jnp.einsum('bnc,cd->bnd', x, ws[li]) + bs[li]
            mean = jnp.mean(y, axis=(0, 1))
            var_b = jnp.var(y, axis=(0, 1))          # biased (normalization)
            n = y.shape[0] * y.shape[1]
            var_u = var_b * n / (n - 1)              # unbiased (running stat)
            rms[li] = (1.0 - BN_MOMENTUM) * rms[li] + BN_MOMENTUM * mean
            rvs[li] = (1.0 - BN_MOMENTUM) * rvs[li] + BN_MOMENTUM * var_u
            x = jnp.maximum((y - mean) / jnp.sqrt(var_b + BN_EPS), 0.0)
    return rms, rvs


def fold_bn_to_slabs(ws, bs, rms, rvs):
    # eval-mode BN (gamma=1, beta=0) folded into the 1x1-conv weights and packed
    # into one lane-dense (K_TOTAL, 128) weight slab + (8, 128) bias slab.
    w_slab = jnp.zeros((K_TOTAL, C_PAD), jnp.float32)
    b_slab = jnp.zeros((8, C_PAD), jnp.float32)
    for li, ((cin, cout), w, b, rm, rv) in enumerate(
            zip(LAYER_DIMS, ws, bs, rms, rvs)):
        s = 1.0 / jnp.sqrt(rv + BN_EPS)
        wf = w * s[None, :]
        bf = (b - rm) * s
        o0 = K_OFF[li]
        w_slab = w_slab.at[o0:o0 + cin, :cout].set(wf)
        b_slab = b_slab.at[li, :cout].set(bf)
    return w_slab, b_slab


# ------------------------------- SE(3) glue ---------------------------------
def _so3_hat(w):
    wx, wy, wz = w[..., 0], w[..., 1], w[..., 2]
    z = jnp.zeros_like(wx)
    return jnp.stack([jnp.stack([z, -wz, wy], -1),
                      jnp.stack([wz, z, -wx], -1),
                      jnp.stack([-wy, wx, z], -1)], -2)


def se3_exp(xi):
    """xi: [..., 6] twist (w, v) -> [..., 4, 4]."""
    w, v = xi[..., 0:3], xi[..., 3:6]
    theta2 = jnp.sum(w * w, axis=-1)[..., None, None]
    theta = jnp.sqrt(theta2)
    small = theta < 1e-8
    th = jnp.where(small, jnp.ones_like(theta), theta)
    A = jnp.where(small, 1.0 - theta2 / 6.0, jnp.sin(th) / th)
    B = jnp.where(small, 0.5 - theta2 / 24.0, (1.0 - jnp.cos(th)) / (th * th))
    C = jnp.where(small, 1.0 / 6.0 - theta2 / 120.0,
                  (th - jnp.sin(th)) / (th * th * th))
    W = _so3_hat(w)
    W2 = jnp.matmul(W, W)
    I3 = jnp.eye(3, dtype=xi.dtype)
    R = I3 + A * W + B * W2
    V = I3 + B * W + C * W2
    t = jnp.einsum('...ij,...j->...i', V, v)
    top = jnp.concatenate([R, t[..., None]], axis=-1)
    bot = jnp.broadcast_to(jnp.array([0.0, 0.0, 0.0, 1.0], xi.dtype),
                           xi.shape[:-1] + (1, 4))
    return jnp.concatenate([top, bot], axis=-2)


def se3_transform(g, p):
    """g: [..., 4, 4]; p: [..., N, 3] -> R p + t."""
    R = g[..., 0:3, 0:3]
    t = g[..., 0:3, 3]
    return jnp.einsum('...ij,...nj->...ni', R, p) + t[..., None, :]


# ---------------------------- PointNetLK forward ----------------------------
@functools.partial(jax.jit,
                   static_argnames=("maxiter", "p0_zero_mean", "p1_zero_mean"))
def pointnetlk_forward(template, source, ws, bs, delta=0.01, xtol=1e-7,
                       p0_zero_mean=True, p1_zero_mean=True, maxiter=10):
    template = template.astype(jnp.float32)
    source = source.astype(jnp.float32)
    B, N, _ = template.shape
    eye4 = jnp.eye(4, dtype=jnp.float32)

    # data_utils.preprocess_data: zero-mean + mean-restoring 4x4 transforms.
    a0 = jnp.broadcast_to(eye4, (B, 4, 4))
    a1 = jnp.broadcast_to(eye4, (B, 4, 4))
    if p0_zero_mean:
        p0_m = jnp.mean(template, axis=1)
        a0 = a0.at[:, 0:3, 3].set(p0_m)
        template = template - p0_m[:, None, :]
    if p1_zero_mean:
        p1_m = jnp.mean(source, axis=1)
        a1 = a1.at[:, 0:3, 3].set(-p1_m)
        source = source - p1_m[:, None, :]

    # handle_batchNorm (training-mode BN stat update, then eval) -> fold BN.
    rms, rvs = bn_stats_after_handle_batchnorm(template, source, ws, bs)
    w_slab, b_slab = fold_bn_to_slabs(ws, bs, rms, rvs)

    identity = jnp.broadcast_to(eye4, (B, 4, 4))
    dt = jnp.broadcast_to(jnp.full((1, 6), delta, jnp.float32), (B, 6))

    # ----- iclk: template features + approx_Jic fused into ONE pallas_call ---
    dt_diag = jax.vmap(jnp.diag)(dt)                       # [B, 6, 6]
    transf = se3_exp(-dt_diag)                             # [B, 6, 4, 4]
    pts_all = jnp.concatenate(
        [template, jnp.repeat(template, 6, axis=0)], axis=0)      # [B*7, N, 3]
    g_all = jnp.concatenate(
        [identity, transf.reshape(-1, 4, 4)], axis=0)              # [B*7, 4, 4]
    feats_all = pointnet_features(pts_all, g_all, w_slab, b_slab)  # [B*7, emb]
    template_features = feats_all[:B]                              # [B, emb]
    f = jnp.transpose(feats_all[B:].reshape(B, 6, EMB_DIMS), (0, 2, 1))
    df = template_features[:, :, None] - f
    J = df / dt[:, None, :]                                # [B, emb, 6]

    # compute_inverse_jacobian
    # TODO(synk): torch InvMatrix custom-autograd (batched 6x6 inverse) has no
    # Pallas primitive; it is computed with jnp.linalg.inv (XLA) here.
    Jt = jnp.transpose(J, (0, 2, 1))
    H = jnp.matmul(Jt, J)                                  # [B, 6, 6]
    pinv = jnp.matmul(jnp.linalg.inv(H), Jt)               # [B, 6, emb]

    # ----- LK iteration: on-device while_loop (no host syncs) -----
    est_T0 = jnp.broadcast_to(eye4, (B, 4, 4))
    series0 = jnp.zeros((maxiter + 1, B, 4, 4), jnp.float32).at[0].set(est_T0)
    r0 = jnp.zeros((B, EMB_DIMS), jnp.float32)

    def cond_fn(state):
        i, _, _, _, done = state
        return jnp.logical_and(i < maxiter, jnp.logical_not(done))

    def body_fn(state):
        i, est_T, _, series, _ = state
        source_features = pointnet_features(source, est_T, w_slab, b_slab)
        r = source_features - template_features
        pose = -jnp.einsum('bij,bj->bi', pinv, r)          # [B, 6]
        check = jnp.max(jnp.sqrt(jnp.sum(pose * pose, axis=1)))
        converged = check < xtol                            # break condition
        est_T_upd = jnp.matmul(se3_exp(pose), est_T)
        series_upd = lax.dynamic_update_index_in_dim(series, est_T_upd, i + 1, 0)
        est_T_new = jnp.where(converged, est_T, est_T_upd)
        series_new = jnp.where(converged, series, series_upd)
        return (i + 1, est_T_new, r, series_new, converged)

    init = (jnp.array(0, jnp.int32), est_T0, r0, series0, jnp.array(False))
    n_iters, est_T, r, series, _ = lax.while_loop(cond_fn, body_fn, init)

    # est_T_series[itr+1:] = est_T  (itr+1 == n_iters, matching the reference).
    idx = jnp.arange(maxiter + 1)
    series = jnp.where((idx >= n_iters)[:, None, None, None],
                       est_T[None], series)

    transformed_source = se3_transform(est_T, source)

    # data_utils.postprocess_data: T' = trans(+p0_mean) @ T @ trans(-p1_mean)
    est_g = est_T
    est_gs = series
    if p0_zero_mean:
        est_g = jnp.matmul(a0, est_g)
        est_gs = jnp.matmul(a0[None], est_gs)
    if p1_zero_mean:
        est_g = jnp.matmul(est_g, a1)
        est_gs = jnp.matmul(est_gs, a1[None])

    return {
        'est_R': est_g[:, 0:3, 0:3],
        'est_t': est_g[:, 0:3, 3],
        'est_T': est_g,
        'r': r,
        'transformed_source': transformed_source,
        'itr': n_iters,
        'est_T_series': est_gs,
    }


# ----------------------------------- main ------------------------------------
if __name__ == "__main__":
    key = jax.random.PRNGKey(0)
    kp, kt = jax.random.split(key)
    ws, bs = init_pointnet_params(kp)

    B, N = 2, 16
    template = jax.random.uniform(kt, (B, N, 3), jnp.float32, -1.0, 1.0)
    gt_twist = jnp.array([[0.02, -0.01, 0.03, 0.05, -0.02, 0.01],
                          [-0.03, 0.02, 0.01, -0.04, 0.03, 0.02]], jnp.float32)
    source = se3_transform(se3_exp(gt_twist), template)

    result = pointnetlk_forward(template, source, ws, bs, maxiter=3)

    jax.block_until_ready(result['est_T'])
    jax.block_until_ready(result['est_T_series'])
    jax.block_until_ready(result['transformed_source'])
    jax.block_until_ready(result['r'])
    print("KERNEL_OK")
</pallas_src>

<mosaic_0001>
module attributes {stable_mosaic.version = 11 : i64} {
  func.func @_pointnet_kernel(%arg0: i32, %arg1: memref<256x8xf32, #tpu.memory_space<vmem>>, %arg2: memref<520x128xf32, #tpu.memory_space<vmem>>, %arg3: memref<8x128xf32, #tpu.memory_space<vmem>>, %arg4: memref<16x128xf32, #tpu.memory_space<vmem>>) attributes {dimension_semantics = [#tpu.dimension_semantics<parallel>], iteration_bounds = array<i64: 1>, scalar_prefetch = 0 : i64, scratch_operands = 0 : i64, tpu.core_type = #tpu.core_type<tc>, window_params = [{transform_indices = @transform_0, window_bounds = array<i64: 256, 8>}, {pipeline_mode = #tpu.pipeline_mode<synchronous>, transform_indices = @transform_1, window_bounds = array<i64: 520, 128>}, {pipeline_mode = #tpu.pipeline_mode<synchronous>, transform_indices = @transform_2, window_bounds = array<i64: 8, 128>}, {transform_indices = @transform_3, window_bounds = array<i64: 16, 128>}]} {
    %c0 = arith.constant 0 : index
    %c0_0 = arith.constant 0 : index
    %0 = vector.load %arg1[%c0, %c0_0] : memref<256x8xf32, #tpu.memory_space<vmem>>, vector<256x8xf32>
    %c0_1 = arith.constant 0 : index
    %c0_2 = arith.constant 0 : index
    %1 = vector.load %arg2[%c0_1, %c0_2] : memref<520x128xf32, #tpu.memory_space<vmem>>, vector<8x128xf32>
    %c0_3 = arith.constant 0 : index
    %c0_4 = arith.constant 0 : index
    %2 = vector.load %arg3[%c0_3, %c0_4] : memref<8x128xf32, #tpu.memory_space<vmem>>, vector<1x128xf32>
    %cst = arith.constant dense<0.000000e+00> : vector<256x128xf32>
    %3 = tpu.matmul %0, %1, %cst {dimension_numbers = #tpu.dot_dimension_numbers<[1], [0], [0], [1], [0, 0, 1, 1], [], []>} : vector<256x8xf32>, vector<8x128xf32>, vector<256x128xf32> -> vector<256x128xf32>
    %4 = vector.broadcast %2 : vector<1x128xf32> to vector<256x128xf32>
    %5 = arith.addf %3, %4 : vector<256x128xf32>
    %cst_5 = arith.constant 0.000000e+00 : f32
    %6 = vector.broadcast %cst_5 : f32 to vector<256x128xf32>
    %7 = arith.maximumf %5, %6 : vector<256x128xf32>
    %c8 = arith.constant 8 : index
    %c0_6 = arith.constant 0 : index
    %8 = vector.load %arg2[%c8, %c0_6] : memref<520x128xf32, #tpu.memory_space<vmem>>, vector<128x128xf32>
    %c1 = arith.constant 1 : index
    %c0_7 = arith.constant 0 : index
    %9 = vector.load %arg3[%c1, %c0_7] : memref<8x128xf32, #tpu.memory_space<vmem>>, vector<1x128xf32>
    %cst_8 = arith.constant dense<0.000000e+00> : vector<256x128xf32>
    %10 = tpu.matmul %7, %8, %cst_8 {dimension_numbers = #tpu.dot_dimension_numbers<[1], [0], [0], [1], [0, 0, 1, 1], [], []>} : vector<256x128xf32>, vector<128x128xf32>, vector<256x128xf32> -> vector<256x128xf32>
    %11 = vector.broadcast %9 : vector<1x128xf32> to vector<256x128xf32>
    %12 = arith.addf %10, %11 : vector<256x128xf32>
    %cst_9 = arith.constant 0.000000e+00 : f32
    %13 = vector.broadcast %cst_9 : f32 to vector<256x128xf32>
    %14 = arith.maximumf %12, %13 : vector<256x128xf32>
    %c136 = arith.constant 136 : index
    %c0_10 = arith.constant 0 : index
    %15 = vector.load %arg2[%c136, %c0_10] : memref<520x128xf32, #tpu.memory_space<vmem>>, vector<128x128xf32>
    %c2 = arith.constant 2 : index
    %c0_11 = arith.constant 0 : index
    %16 = vector.load %arg3[%c2, %c0_11] : memref<8x128xf32, #tpu.memory_space<vmem>>, vector<1x128xf32>
    %cst_12 = arith.constant dense<0.000000e+00> : vector<256x128xf32>
    %17 = tpu.matmul %14, %15, %cst_12 {dimension_numbers = #tpu.dot_dimension_numbers<[1], [0], [0], [1], [0, 0, 1, 1], [], []>} : vector<256x128xf32>, vector<128x128xf32>, vector<256x128xf32> -> vector<256x128xf32>
    %18 = vector.broadcast %16 : vector<1x128xf32> to vector<256x128xf32>
    %19 = arith.addf %17, %18 : vector<256x128xf32>
    %cst_13 = arith.constant 0.000000e+00 : f32
    %20 = vector.broadcast %cst_13 : f32 to vector<256x128xf32>
    %21 = arith.maximumf %19, %20 : vector<256x128xf32>
    %c264 = arith.constant 264 : index
    %c0_14 = arith.constant 0 : index
    %22 = vector.load %arg2[%c264, %c0_14] : memref<520x128xf32, #tpu.memory_space<vmem>>, vector<128x128xf32>
    %c3 = arith.constant 3 : index
    %c0_15 = arith.constant 0 : index
    %23 = vector.load %arg3[%c3, %c0_15] : memref<8x128xf32, #tpu.memory_space<vmem>>, vector<1x128xf32>
    %cst_16 = arith.constant dense<0.000000e+00> : vector<256x128xf32>
    %24 = tpu.matmul %21, %22, %cst_16 {dimension_numbers = #tpu.dot_dimension_numbers<[1], [0], [0], [1], [0, 0, 1, 1], [], []>} : vector<256x128xf32>, vector<128x128xf32>, vector<256x128xf32> -> vector<256x128xf32>
    %25 = vector.broadcast %23 : vector<1x128xf32> to vector<256x128xf32>
    %26 = arith.addf %24, %25 : vector<256x128xf32>
    %cst_17 = arith.constant 0.000000e+00 : f32
    %27 = vector.broadcast %cst_17 : f32 to vector<256x128xf32>
    %28 = arith.maximumf %26, %27 : vector<256x128xf32>
    %c392 = arith.constant 392 : index
    %c0_18 = arith.constant 0 : index
    %29 = vector.load %arg2[%c392, %c0_18] : memref<520x128xf32, #tpu.memory_space<vmem>>, vector<128x128xf32>
    %c4 = arith.constant 4 : index
    %c0_19 = arith.constant 0 : index
    %30 = vector.load %arg3[%c4, %c0_19] : memref<8x128xf32, #tpu.memory_space<vmem>>, vector<1x128xf32>
    %cst_20 = arith.constant dense<0.000000e+00> : vector<256x128xf32>
    %31 = tpu.matmul %28, %29, %cst_20 {dimension_numbers = #tpu.dot_dimension_numbers<[1], [0], [0], [1], [0, 0, 1, 1], [], []>} : vector<256x128xf32>, vector<128x128xf32>, vector<256x128xf32> -> vector<256x128xf32>
    %32 = vector.broadcast %30 : vector<1x128xf32> to vector<256x128xf32>
    %33 = arith.addf %31, %32 : vector<256x128xf32>
    %cst_21 = arith.constant 0.000000e+00 : f32
    %34 = vector.broadcast %cst_21 : f32 to vector<256x128xf32>
    %35 = arith.maximumf %33, %34 : vector<256x128xf32>
    %36 = vector.shape_cast %35 : vector<256x128xf32> to vector<16x16x128xf32>
    %cst_22 = arith.constant dense<0xFF800000> : vector<16x128xf32>
    %37 = vector.multi_reduction <maximumf>, %36, %cst_22 [1] : vector<16x16x128xf32> to vector<16x128xf32>
    %c0_23 = arith.constant 0 : index
    %c0_24 = arith.constant 0 : index
    %38 = vector.load %arg4[%c0_23, %c0_24] : memref<16x128xf32, #tpu.memory_space<vmem>>, vector<16x128xf32>
    tpu.vector_store %arg4[%c0_23, %c0_24], %37 {strides = array<i32>} : memref<16x128xf32, #tpu.memory_space<vmem>>, vector<16x128xf32>,
    return
  }
  func.func @transform_0(%arg0: i32) -> (i32, i32) {
    %c0_i32 = arith.constant 0 : i32
    %c0_i32_0 = arith.constant 0 : i32
    return %arg0, %c0_i32 : i32, i32
  }
  func.func @transform_1(%arg0: i32) -> (i32, i32) {
    %c0_i32 = arith.constant 0 : i32
    %c0_i32_0 = arith.constant 0 : i32
    %c0_i32_1 = arith.constant 0 : i32
    return %c0_i32, %c0_i32_0 : i32, i32
  }
  func.func @transform_2(%arg0: i32) -> (i32, i32) {
    %c0_i32 = arith.constant 0 : i32
    %c0_i32_0 = arith.constant 0 : i32
    %c0_i32_1 = arith.constant 0 : i32
    return %c0_i32, %c0_i32_0 : i32, i32
  }
  func.func @transform_3(%arg0: i32) -> (i32, i32) {
    %c0_i32 = arith.constant 0 : i32
    %c0_i32_0 = arith.constant 0 : i32
    return %arg0, %c0_i32 : i32, i32
  }
}

</mosaic_0001>

<llo_original>
// kernel: custom-call.11
$region0: #{custom-call.11}
  %s0 = inlined_call_operand.vmem [shape: f32[2,6,6], index: 0, kind: input, shape index: {}]
  %s1 = inlined_call_operand.vmem [shape: f32[2,6,6], index: 1, kind: output, shape index: {0}]
  %s2 = inlined_call_operand.hbm [shape: s32[2,6], index: 2, kind: output, shape index: {1}]
  %s3 = inlined_call_operand.vmem [shape: s32[2,6], index: 3, kind: output, shape index: {2}]
  %4 = xla_tuple %s1, %s2, %s3
  $region1: #{custom-call.11} parent=0
    #allocation0 [shape = 'u8[8192]{0}', space=vmem, size = 0x2000, scoped, tag = 'operand span for operand 0']
    #allocation1 [shape = 'u8[8192]{0}', space=vmem, size = 0x2000, scoped, tag = 'operand span for operand 1']
    #allocation2 [shape = 'u8[4096]{0}', space=vmem, size = 0x1000, scoped, tag = 'operand span for operand 2']
    #allocation3 [shape = 'u8[2048]{0}', space=vmem, size = 0x800, scoped, tag = 'packed  for operand 2']
    #allocation4 [shape = 's32[2]{0}', space=sflag, size = 0x8, scoped, tag = 'scoped memory for custom-call.11']
    #allocation5 [shape = 'u8[4096]{0}', space=vmem, size = 0x1000, scoped, tag = 'operand span for operand 3']
    #allocation6 [shape = 'u8[2048]{0}', space=vmem, size = 0x800, scoped, tag = 'packed  for operand 3']
    %5 = vsyncpa [#allocation4], 0
    %s6 = scalar_lea.sflag [#allocation4], 1
    %7 = vsyncpa %s6, 0
    loop: start=0, step=1, limit=4
    $region2: #{custom-call.11} parent=1 // loop_pre_header
      _
    $region3: #{custom-call.11} parent=1 // loop_header
      %s9 = sphi 0, %s13
      %p10 = scmp.ge.s32.totalorder %s9, 4
      %s21 = sphi 0, %s23
      %s24 = sphi 0, %s21
      %s25 = sphi 0, %s24
      %s41 = sphi 0, %s25
      %s49 = sphi 0, %s51
      %s52 = sphi 0, %s49
      %s53 = sphi 0, %s52
      %s69 = sphi 0, %s53
    $region4: #{custom-call.11} parent=1 // loop_header_branch
      %12 = sbr.rel (%p10) target = $region8
    $region5: #{custom-call.11} parent=1 // loop_body
      %s14 = ssub.s32 %s9, 1
      %s15 = ssub.s32 %s9, 2
      %s16 = sadd.s32 %s9, 1
      %s17 = sshrl.u32 %s9, 3
      %s18 = sshrl.u32 %s16, 3
      %s19 = ssub.s32 %s17, %s18
      %p20 = scmp.eq.s32.totalorder %s19, 0
      %s22 = sadd.s32 %s21, 1
      %s23 = scalar_select %p20, %s21, %s22
      %p26 = pneg %p20
      %p27 = scmp.eq.s32.totalorder %s9, 1
      %p28 = por %p26, %p27
      %p29 = scmp.ne.s32.totalorder %s21, %s24
      %p30 = scmp.eq.s32.totalorder %s9, 0
      %p31 = por %p29, %p30
      %p32 = scmp.ne.s32.totalorder %s21, %s24
      %p33 = scmp.eq.s32.totalorder %s14, 1
      %p34 = por %p32, %p33
      %p35 = scmp.ne.s32.totalorder %s24, %s25
      %p36 = scmp.eq.s32.totalorder %s14, 0
      %p37 = por %p35, %p36
      %p38 = scmp.ne.s32.totalorder %s24, %s25
      %p39 = scmp.eq.s32.totalorder %s15, 1
      %p40 = por %p38, %p39
      %p42 = scmp.ne.s32.totalorder %s25, %s41
      %p43 = scmp.eq.s32.totalorder %s15, 0
      %p44 = por %p42, %p43
      %s45 = sshrl.u32 %s9, 3
      %s46 = sshrl.u32 %s16, 3
      %s47 = ssub.s32 %s45, %s46
      %p48 = scmp.eq.s32.totalorder %s47, 0
      %s50 = sadd.s32 %s49, 1
      %s51 = scalar_select %p48, %s49, %s50
      %p54 = pneg %p48
      %p55 = scmp.eq.s32.totalorder %s9, 1
      %p56 = por %p54, %p55
      %p57 = scmp.ne.s32.totalorder %s49, %s52
      %p58 = scmp.eq.s32.totalorder %s9, 0
      %p59 = por %p57, %p58
      %p60 = scmp.ne.s32.totalorder %s49, %s52
      %p61 = scmp.eq.s32.totalorder %s14, 1
      %p62 = por %p60, %p61
      %p63 = scmp.ne.s32.totalorder %s52, %s53
      %p64 = scmp.eq.s32.totalorder %s14, 0
      %p65 = por %p63, %p64
      %p66 = scmp.ne.s32.totalorder %s52, %s53
      %p67 = scmp.eq.s32.totalorder %s15, 1
      %p68 = por %p66, %p67
      %p70 = scmp.ne.s32.totalorder %s53, %s69
      %p71 = scmp.eq.s32.totalorder %s15, 0
      %p72 = por %p70, %p71
      %p73 = scmp.le.s32.totalorder 1, %s9
      %p74 = scmp.lt.s32.totalorder %s9, 3
      %p75 = pnand %p73, %p74
      %p76 = pneg %p75
      // Predicated region
      $region9: #{custom-call.11} parent=5 // pred_check
        _
      $region10: #{custom-call.11} parent=5 // pred_check_branch
        %78 = sbr.rel (%p75) target = $region12
      $region11: #{custom-call.11} parent=5 // pred_region
        %s79 = ssub.s32 %s9, 1
      $region12: #{custom-call.11} parent=5 // pred_fallthru
        _
      %p80 = scmp.lt.s32.totalorder %s9, 2
      // Predicated region
      $region13: #{custom-call.11} parent=5 // pred_check
        %p81 = pneg %p80
      $region14: #{custom-call.11} parent=5 // pred_check_branch
        %83 = sbr.rel (%p81) target = $region16
      $region15: #{custom-call.11} parent=5 // pred_region
        %s84 = sand.u32 %s9, 1
        %s85 = sand.u32 %s9, 1
        %s86 = smul.addr %s85, 8
        %s87 = scalar_lea.vmem [#allocation0], %s86
        %s88 = smul.addr %s9, 8
        %s89 = scalar_lea.vmem %s0, %s88
        // Predicated region
        $region17: #{custom-call.11} parent=15 // pred_check
          _
        $region18: #{custom-call.11} parent=15 // pred_check_branch
          %91 = sbr.rel (0) target = $region20
        $region19: #{custom-call.11} parent=15 // pred_region
          // Predicated region
          $region21: #{custom-call.11} parent=19 // pred_check
            _
          $region22: #{custom-call.11} parent=19 // pred_check_branch
            %93 = sbr.rel (0) target = $region24
          $region23: #{custom-call.11} parent=19 // pred_region
            // Predicated region
            $region36: #{custom-call.11} parent=23 // pred_check
              _
            $region37: #{custom-call.11} parent=23 // pred_check_branch
              %108 = sbr.rel (0) target = $region39
            $region38: #{custom-call.11} parent=23 // pred_region
              loop: start=0, step=1, limit=1
              $region40: #{custom-call.11} parent=38 // loop_pre_header
                _
              $region41: #{custom-call.11} parent=38 // loop_header
                %s110 = sphi 0, %s114
                %p111 = scmp.ge.s32.totalorder %s110, 1
                %s115 = sphi %s89, %s89
                %s116 = sphi %s87, %s87
              $region42: #{custom-call.11} parent=38 // loop_header_branch
                %113 = sbr.rel (%p111) target = $region46
              $region43: #{custom-call.11} parent=38 // loop_body
                %v117 = vld [vmem:[%s115] sm:$0xff]
                %118 = vst [vmem:[%s116] sm:$0xff] %v117
              $region44: #{custom-call.11} parent=38 // loop_footer
                %s114 = sadd.s32 1, %s110
              $region45: #{custom-call.11} parent=38 // loop_footer_branch
                %109 = sbr.rel target = $region41
              $region46: #{custom-call.11} parent=38 // loop_exit
                _
            $region39: #{custom-call.11} parent=23 // pred_fallthru
              _
            // Predicated region
            $region47: #{custom-call.11} parent=23 // pred_check
              _
            $region48: #{custom-call.11} parent=23 // pred_check_branch
              %120 = sbr.rel target = $region50
            $region49: #{custom-call.11} parent=23 // pred_region
              _
            $region50: #{custom-call.11} parent=23 // pred_fallthru
              _
          $region24: #{custom-call.11} parent=19 // pred_fallthru
            _
          // Predicated region
          $region25: #{custom-call.11} parent=19 // pred_check
            _
          $region26: #{custom-call.11} parent=19 // pred_check_branch
            %95 = sbr.rel target = $region28
          $region27: #{custom-call.11} parent=19 // pred_region
            loop: start=0, step=1, limit=1
            $region29: #{custom-call.11} parent=27 // loop_pre_header
              _
            $region30: #{custom-call.11} parent=27 // loop_header
              %s98 = sphi 0, %s102
              %p99 = scmp.ge.s32.totalorder %s98, 1
              %s103 = sphi %s89, %s89
              %s104 = sphi %s87, %s87
            $region31: #{custom-call.11} parent=27 // loop_header_branch
              %101 = sbr.rel (%p99) target = $region35
            $region32: #{custom-call.11} parent=27 // loop_body
              %v105 = vld [vmem:[%s103] sm:$0xff]
              %106 = vst [vmem:[%s104] sm:$0xff] %v105
            $region33: #{custom-call.11} parent=27 // loop_footer
              %s102 = sadd.s32 1, %s98
            $region34: #{custom-call.11} parent=27 // loop_footer_branch
              %97 = sbr.rel target = $region30
            $region35: #{custom-call.11} parent=27 // loop_exit
              _
          $region28: #{custom-call.11} parent=19 // pred_fallthru
            _
        $region20: #{custom-call.11} parent=15 // pred_fallthru
          _
        %121 = vnop
      $region16: #{custom-call.11} parent=5 // pred_fallthru
        _
      %p122 = scmp.le.s32.totalorder 1, %s9
      %p123 = scmp.lt.s32.totalorder %s9, 3
      %p124 = pnand %p122, %p123
      %p125 = pneg %p124
      // Predicated region
      $region51: #{custom-call.11} parent=5 // pred_check
        _
      $region52: #{custom-call.11} parent=5 // pred_check_branch
        %127 = sbr.rel (%p124) target = $region54
      $region53: #{custom-call.11} parent=5 // pred_region
        #allocation7 [shape = 's32[6,128]{1,0}', space=vmem, size = 0x1000, scoped, tag = 'scratch for permutations']
        %s128 = ssub.s32 %s9, 1
        %s129 = sand.u32 %s14, 1
        %s130 = sand.u32 %s14, 1
        %s131 = smul.addr %s130, 8
        %s132 = scalar_lea.vmem [#allocation0], %s131
        %s133 = sand.u32 %s14, 1
        %s134 = sand.u32 %s14, 1
        %s135 = smul.addr %s134, 8
        %s136 = scalar_lea.vmem [#allocation0], %s135
        %s137 = sand.u32 %s14, 1
        %s138 = sand.u32 %s14, 1
        %s139 = smul.addr %s138, 8
        %s140 = scalar_lea.vmem [#allocation1], %s139
        %p141 = pneg %p37
        %p142 = pneg %p34
        %s143 = sand.u32 %s24, 1
        %s144 = scalar_lea.sflag [#allocation4], %s143
        %s145 = sand.u32 %s24, 1
        %s146 = smul.addr %s145, 2
        %s147 = scalar_lea.vmem [#allocation3], %s146
        %p148 = pneg %p65
        %p149 = pneg %p62
        %s150 = sand.u32 %s52, 1
        %s151 = sand.u32 %s52, 1
        %s152 = smul.addr %s151, 2
        %s153 = scalar_lea.vmem [#allocation6], %s152
        %s154 = sshrl.u32 %s14, 3
        %s155 = sshrl.u32 %s14, 3
        %v156 = vld [vmem:[%s132] sm:$0xff]
        %157 = vst [vmem:[%s140] sm:$0xff] %v156
        %s158 = sand.u32 %s14, 7
        %s159 = scalar_lea.vmem [#allocation2], %s158
        %s160 = sand.u32 %s14, 7
        %s161 = scalar_lea.vmem [#allocation5], %s160
        %162 = vst [vmem:[%s159] sm:$0x1] 0
        %v163 = vlaneseq
        %v164 = vshrl.u32 %v163, 7
        %v165 = vmov %v164
        %167 = vst [vmem:[#allocation7] sm:$0xff] %v165
        loop: start=0, step=1, limit=6
        $region56: #{custom-call.11} parent=53 // loop_pre_header
          _
        $region57: #{custom-call.11} parent=53 // loop_header
          %s169 = sphi 0, %s173
          %p170 = scmp.ge.s32.totalorder %s169, 6
        $region58: #{custom-call.11} parent=53 // loop_header_branch
          %172 = sbr.rel (%p170) target = $region62
        $region59: #{custom-call.11} parent=53 // loop_body
          %v174 = vstv %s169
          %v175 = vlaneseq
          %v176 = vshrl.u32 %v175, 7
          %v177 = vmov %v176
          %v178 = vld [vmem:[%s140] sm:$0xff]
          %v179 = vand.u32 2147483647, %v178
          %v181 = vstv %s169
          %vm182 = vcmp.ge.s32.totalorder %v177, %v181
          %vm183 = vcmp.lt.s32.totalorder %v177, 6
          %vm184 = vmand %vm182, %vm183
          %vm185 = vcmp.lt.f32.partialorder -inf, %v179
          %vm186 = vmand %vm184, %vm185
          %v187 = vsel %vm186, %v177, %v174
          %v188 = vsel %vm186, %v179, -inf
          %v189 = vrot.slane %v188, 1
          %v190 = vrot.slane %v187, 1
          %vm191 = vcmp.ge.f32.partialorder %v189, %v188
          %v192 = vsel %vm191, %v189, %v188
          %v193 = vsel %vm191, %v190, %v187
          %v194 = vrot.slane %v189, 1
          %v195 = vrot.slane %v190, 1
          %vm196 = vcmp.ge.f32.partialorder %v194, %v192
          %v197 = vsel %vm196, %v194, %v192
          %v198 = vsel %vm196, %v195, %v193
          %v199 = vrot.slane %v194, 1
          %v200 = vrot.slane %v195, 1
          %vm201 = vcmp.ge.f32.partialorder %v199, %v197
          %v202 = vsel %vm201, %v199, %v197
          %v203 = vsel %vm201, %v200, %v198
          %v204 = vrot.slane %v199, 1
          %v205 = vrot.slane %v200, 1
          %vm206 = vcmp.ge.f32.partialorder %v204, %v202
          %v207 = vsel %vm206, %v204, %v202
          %v208 = vsel %vm206, %v205, %v203
          %v209 = vrot.slane %v204, 1
          %v210 = vrot.slane %v205, 1
          %vm211 = vcmp.ge.f32.partialorder %v209, %v207
          %v212 = vsel %vm211, %v209, %v207
          %v213 = vsel %vm211, %v210, %v208
          %v214 = vrot.slane %v209, 1
          %v215 = vrot.slane %v210, 1
          %vm216 = vcmp.ge.f32.partialorder %v214, %v212
          %v217 = vsel %vm216, %v214, %v212
          %v218 = vsel %vm216, %v215, %v213
          %v219 = vrot.slane %v214, 1
          %v220 = vrot.slane %v215, 1
          %vm221 = vcmp.ge.f32.partialorder %v219, %v217
          %v222 = vsel %vm221, %v219, %v217
          %v223 = vsel %vm221, %v220, %v218
          %s224 = ssub.s32 128, %s169
          %225 = vrot.lane.b32.xlu0 %v223, %s224
          %v226 = vpop.permute.xlu0 %225
          %s227 = vtos %v226
          %v228 = vstv %s169
          %v229 = vlaneseq
          %v230 = vand.u32 %v229, 127
          %vm231 = vcmp.eq.s32.totalorder %v230, %v228
          %v232 = vstv %s227
          %v233 = vld [vmem:[%s159] ss:$0 sm:$0xff]
          %v234 = vsel %vm231, %v232, %v233
          %235 = vst [vmem:[%s159] sm:$0x1] %v234
          %s236 = scalar_lea.vmem %s140, %s169 [#allocation1]
          %s237 = scalar_lea.vmem %s140, %s227 [#allocation1]
          %v238 = vld [vmem:[%s236] ss:$0 sm:$0xff]
          %v239 = vld [vmem:[%s237] ss:$0 sm:$0xff]
          %240 = vst [vmem:[%s237] sm:$0x1] %v238
          %241 = vst [vmem:[%s236] sm:$0x1] %v239
          %s242 = scalar_lea.vmem [#allocation7], %s169
          %s243 = scalar_lea.vmem [#allocation7], %s227
          %v244 = vld [vmem:[%s242] ss:$0 sm:$0xff]
          %v245 = vld [vmem:[%s243] ss:$0 sm:$0xff]
          %246 = vst [vmem:[%s243] sm:$0x1] %v244
          %247 = vst [vmem:[%s242] sm:$0x1] %v245
          %vm248 = vcmp.ne.f32.partialorder %v239, 0.0
          %vm249 = vmand %vm231, %vm248
          %v250 = vsel %vm249, %v239, 1.0
          %v251 = vlaneseq
          %v252 = vand.u32 %v251, 127
          %v253 = vstv %s169
          %vm254 = vcmp.gt.s32.totalorder %v252, %v253
          %v255 = vsel %vm254, %v239, 0.0
          %v256 = vlaneseq
          %v257 = vshrl.u32 %v256, 7
          %v258 = vmov %v257
          %v259 = vld [vmem:[%s140] sm:$0xff]
          %v261 = vstv %s169
          %vm262 = vcmp.gt.s32.totalorder %v258, %v261
          %v263 = vsel %vm262, %v250, 1.0
          %v264 = vrcp.pop %v263
          %v265 = vmul.f32 %v259, %v264
          %vm266 = vmand %vm262, %vm231
          %v267 = vsel %vm266, %v265, 0.0
          %268 = vadd.xlane.f32.xlu0 %v267
          %v269 = vpop.xlane.xlu0 %268
          %v270 = vmul.f32 %v269, %v255
          %v271 = vsub.f32 %v265, %v270
          %272 = vst [vmem:[%s140] sm:$0xff] %v271
        $region60: #{custom-call.11} parent=53 // loop_footer
          %s173 = sadd.s32 1, %s169
        $region61: #{custom-call.11} parent=53 // loop_footer_branch
          %168 = sbr.rel target = $region57
        $region62: #{custom-call.11} parent=53 // loop_exit
          _
        %v273 = vld [vmem:[#allocation7] sm:$0xff]
        %s274 = scalar_lea.vmem [#allocation7], 8
        %s275 = scalar_lea.vmem [#allocation7], 16
        %s276 = scalar_lea.vmem [#allocation7], 24
        %s277 = scalar_lea.vmem [#allocation7], 32
        %s278 = scalar_lea.vmem [#allocation7], 40
        %s279 = scalar_lea.vmem [#allocation7], 48
        %s280 = scalar_lea.vmem [#allocation7], 56
        %s281 = scalar_lea.vmem [#allocation7], 64
        %s282 = scalar_lea.vmem [#allocation7], 72
        %s283 = scalar_lea.vmem [#allocation7], 80
        %s284 = scalar_lea.vmem [#allocation7], 88
        %s285 = scalar_lea.vmem [#allocation7], 96
        %s286 = scalar_lea.vmem [#allocation7], 104
        %s287 = scalar_lea.vmem [#allocation7], 112
        %s288 = scalar_lea.vmem [#allocation7], 120
        %289 = vxpose.xlu0.b32.start [1/16] %v273, 128
        %290 = vxpose.xlu0.b32.cont [2/16] 0, 128
        %291 = vxpose.xlu0.b32.cont [3/16] 0, 128
        %292 = vxpose.xlu0.b32.cont [4/16] 0, 128
        %293 = vxpose.xlu0.b32.cont [5/16] 0, 128
        %294 = vxpose.xlu0.b32.cont [6/16] 0, 128
        %295 = vxpose.xlu0.b32.cont [7/16] 0, 128
        %296 = vxpose.xlu0.b32.cont [8/16] 0, 128
        %297 = vxpose.xlu0.b32.cont [9/16] 0, 128
        %298 = vxpose.xlu0.b32.cont [10/16] 0, 128
        %299 = vxpose.xlu0.b32.cont [11/16] 0, 128
        %300 = vxpose.xlu0.b32.cont [12/16] 0, 128
        %301 = vxpose.xlu0.b32.cont [13/16] 0, 128
        %302 = vxpose.xlu0.b32.cont [14/16] 0, 128
        %303 = vxpose.xlu0.b32.cont [15/16] 0, 128
        %304 = vxpose.xlu0.b32.end [16/16] 0, 128
        %v305 = vpop.trf.xlu0
        %v306 = vpop.trf.xlu0
        %v307 = vpop.trf.xlu0
        %v308 = vpop.trf.xlu0
        %v309 = vpop.trf.xlu0
        %v310 = vpop.trf.xlu0
        %v311 = vpop.trf.xlu0
        %v312 = vpop.trf.xlu0
        %v313 = vpop.trf.xlu0
        %v314 = vpop.trf.xlu0
        %v315 = vpop.trf.xlu0
        %v316 = vpop.trf.xlu0
        %v317 = vpop.trf.xlu0
        %v318 = vpop.trf.xlu0
        %v319 = vpop.trf.xlu0
        %v320 = vpop.trf.xlu0
        %321 = vst [vmem:[%s161] sm:$0x1] %v305
        %s323 = sshllo.u32 0, 2
        %v325 = vld [vmem:[#allocation2] sm:%s323]
        %s326 = sshllo.u32 0, 2
        %327 = vst [vmem:[%s147] sm:%s326] %v325
        %s329 = sshllo.u32 0, 2
        %v331 = vld [vmem:[#allocation5] sm:%s329]
        %s332 = sshllo.u32 0, 2
        %333 = vst [vmem:[%s153] sm:%s332] %v331
        %s334 = sand.u32 %s14, 1
        %s335 = sand.u32 %s14, 1
        %s336 = smul.addr %s335, 8
        %s337 = scalar_lea.vmem [#allocation1], %s336
        %s338 = sand.u32 %s24, 1
        %s339 = scalar_lea.sflag [#allocation4], %s338
        %s340 = sand.u32 %s24, 1
        %s341 = smul.addr %s340, 2
        %s342 = scalar_lea.vmem [#allocation3], %s341
        %s343 = sand.u32 %s52, 1
        %s344 = sand.u32 %s52, 1
        %s345 = smul.addr %s344, 2
        %s346 = scalar_lea.vmem [#allocation6], %s345
        %s347 = smul.addr %s14, 8
        %s348 = scalar_lea.vmem %s1, %s347
        // Predicated region
        $region63: #{custom-call.11} parent=53 // pred_check
          _
        $region64: #{custom-call.11} parent=53 // pred_check_branch
          %350 = sbr.rel (0) target = $region66
        $region65: #{custom-call.11} parent=53 // pred_region
          // Predicated region
          $region67: #{custom-call.11} parent=65 // pred_check
            _
          $region68: #{custom-call.11} parent=65 // pred_check_branch
            %352 = sbr.rel (0) target = $region70
          $region69: #{custom-call.11} parent=65 // pred_region
            // Predicated region
            $region82: #{custom-call.11} parent=69 // pred_check
              _
            $region83: #{custom-call.11} parent=69 // pred_check_branch
              %367 = sbr.rel (0) target = $region85
            $region84: #{custom-call.11} parent=69 // pred_region
              loop: start=0, step=1, limit=1
              $region86: #{custom-call.11} parent=84 // loop_pre_header
                _
              $region87: #{custom-call.11} parent=84 // loop_header
                %s369 = sphi 0, %s373
                %p370 = scmp.ge.s32.totalorder %s369, 1
                %s374 = sphi %s337, %s337
                %s375 = sphi %s348, %s348
              $region88: #{custom-call.11} parent=84 // loop_header_branch
                %372 = sbr.rel (%p370) target = $region92
              $region89: #{custom-call.11} parent=84 // loop_body
                %v376 = vld [vmem:[%s374] sm:$0xff]
                %377 = vst [vmem:[%s375] sm:$0xff] %v376
              $region90: #{custom-call.11} parent=84 // loop_footer
                %s373 = sadd.s32 1, %s369
              $region91: #{custom-call.11} parent=84 // loop_footer_branch
                %368 = sbr.rel target = $region87
              $region92: #{custom-call.11} parent=84 // loop_exit
                _
            $region85: #{custom-call.11} parent=69 // pred_fallthru
              _
            // Predicated region
            $region93: #{custom-call.11} parent=69 // pred_check
              _
            $region94: #{custom-call.11} parent=69 // pred_check_branch
              %379 = sbr.rel target = $region96
            $region95: #{custom-call.11} parent=69 // pred_region
              _
            $region96: #{custom-call.11} parent=69 // pred_fallthru
              _
          $region70: #{custom-call.11} parent=65 // pred_fallthru
            _
          // Predicated region
          $region71: #{custom-call.11} parent=65 // pred_check
            _
          $region72: #{custom-call.11} parent=65 // pred_check_branch
            %354 = sbr.rel target = $region74
          $region73: #{custom-call.11} parent=65 // pred_region
            loop: start=0, step=1, limit=1
            $region75: #{custom-call.11} parent=73 // loop_pre_header
              _
            $region76: #{custom-call.11} parent=73 // loop_header
              %s357 = sphi 0, %s361
              %p358 = scmp.ge.s32.totalorder %s357, 1
              %s362 = sphi %s337, %s337
              %s363 = sphi %s348, %s348
            $region77: #{custom-call.11} parent=73 // loop_header_branch
              %360 = sbr.rel (%p358) target = $region81
            $region78: #{custom-call.11} parent=73 // loop_body
              %v364 = vld [vmem:[%s362] sm:$0xff]
              %365 = vst [vmem:[%s363] sm:$0xff] %v364
            $region79: #{custom-call.11} parent=73 // loop_footer
              %s361 = sadd.s32 1, %s357
            $region80: #{custom-call.11} parent=73 // loop_footer_branch
              %356 = sbr.rel target = $region76
            $region81: #{custom-call.11} parent=73 // loop_exit
              _
          $region74: #{custom-call.11} parent=65 // pred_fallthru
            _
        $region66: #{custom-call.11} parent=53 // pred_fallthru
          _
        %380 = vnop
        // Predicated region
        $region97: #{custom-call.11} parent=53 // pred_check
          %p381 = pneg %p34
        $region98: #{custom-call.11} parent=53 // pred_check_branch
          %383 = sbr.rel (%p381) target = $region100
        $region99: #{custom-call.11} parent=53 // pred_region
          %s384 = sshrl.u32 %s14, 3
          %s386 = ssub.s32 32, 32
          %387 = vsyncadd %s339, %s386
          %s388 = smul.addr %s384, 32
          %s389 = scalar_lea.hbm %s2, %s388
          %s391 = sshll.u32 %s342, 4
          %s392 = int_to_ptr.vmem [resolvable:$true] %s391
          %394 = dma.vmem_to_hbm [thread:$0]  %s392, 32, %s389, %s339
        $region100: #{custom-call.11} parent=53 // pred_fallthru
          _
        // Predicated region
        $region101: #{custom-call.11} parent=53 // pred_check
          %p395 = pneg %p62
        $region102: #{custom-call.11} parent=53 // pred_check_branch
          %397 = sbr.rel (%p395) target = $region104
        $region103: #{custom-call.11} parent=53 // pred_region
          %s398 = sshrl.u32 %s14, 3
          %s399 = smul.addr %s398, 2
          %s400 = scalar_lea.vmem %s3, %s399
          // Predicated region
          $region105: #{custom-call.11} parent=103 // pred_check
            _
          $region106: #{custom-call.11} parent=103 // pred_check_branch
            %402 = sbr.rel (0) target = $region108
          $region107: #{custom-call.11} parent=103 // pred_region
            // Predicated region
            $region109: #{custom-call.11} parent=107 // pred_check
              _
            $region110: #{custom-call.11} parent=107 // pred_check_branch
              %404 = sbr.rel target = $region112
            $region111: #{custom-call.11} parent=107 // pred_region
              // Predicated region
              $region124: #{custom-call.11} parent=111 // pred_check
                _
              $region125: #{custom-call.11} parent=111 // pred_check_branch
                %419 = sbr.rel (0) target = $region127
              $region126: #{custom-call.11} parent=111 // pred_region
                loop: start=0, step=1, limit=1
                $region128: #{custom-call.11} parent=126 // loop_pre_header
                  _
                $region129: #{custom-call.11} parent=126 // loop_header
                  %s422 = sphi 0, %s426
                  %p423 = scmp.ge.s32.totalorder %s422, 1
                  %s427 = sphi %s346, %s346
                  %s428 = sphi %s400, %s400
                $region130: #{custom-call.11} parent=126 // loop_header_branch
                  %425 = sbr.rel (%p423) target = $region134
                $region131: #{custom-call.11} parent=126 // loop_body
                  %v429 = vld [vmem:[%s427] sm:$0x3]
                  %430 = vst [vmem:[%s428] sm:$0x3] %v429
                $region132: #{custom-call.11} parent=126 // loop_footer
                  %s426 = sadd.s32 1, %s422
                $region133: #{custom-call.11} parent=126 // loop_footer_branch
                  %421 = sbr.rel target = $region129
                $region134: #{custom-call.11} parent=126 // loop_exit
                  _
              $region127: #{custom-call.11} parent=111 // pred_fallthru
                _
            $region112: #{custom-call.11} parent=107 // pred_fallthru
              _
            // Predicated region
            $region113: #{custom-call.11} parent=107 // pred_check
              _
            $region114: #{custom-call.11} parent=107 // pred_check_branch
              %406 = sbr.rel (0) target = $region116
            $region115: #{custom-call.11} parent=107 // pred_region
              loop: start=0, step=1, limit=1
              $region117: #{custom-call.11} parent=115 // loop_pre_header
                _
              $region118: #{custom-call.11} parent=115 // loop_header
                %s409 = sphi 0, %s413
                %p410 = scmp.ge.s32.totalorder %s409, 1
                %s414 = sphi %s346, %s346
                %s415 = sphi %s400, %s400
              $region119: #{custom-call.11} parent=115 // loop_header_branch
                %412 = sbr.rel (%p410) target = $region123
              $region120: #{custom-call.11} parent=115 // loop_body
                %v416 = vld [vmem:[%s414] sm:$0x3]
                %417 = vst [vmem:[%s415] sm:$0x3] %v416
              $region121: #{custom-call.11} parent=115 // loop_footer
                %s413 = sadd.s32 1, %s409
              $region122: #{custom-call.11} parent=115 // loop_footer_branch
                %408 = sbr.rel target = $region118
              $region123: #{custom-call.11} parent=115 // loop_exit
                _
            $region116: #{custom-call.11} parent=107 // pred_fallthru
              _
          $region108: #{custom-call.11} parent=103 // pred_fallthru
            _
          %431 = vnop
        $region104: #{custom-call.11} parent=53 // pred_fallthru
          _
      $region54: #{custom-call.11} parent=5 // pred_fallthru
        _
      %p432 = scmp.le.s32.totalorder 2, %s9
      // Predicated region
      $region135: #{custom-call.11} parent=5 // pred_check
        %p433 = pneg %p432
      $region136: #{custom-call.11} parent=5 // pred_check_branch
        %435 = sbr.rel (%p433) target = $region138
      $region137: #{custom-call.11} parent=5 // pred_region
        %s436 = ssub.s32 %s9, 2
        %s437 = sand.u32 %s15, 1
        %s438 = sand.u32 %s15, 1
        %s439 = smul.addr %s438, 8
        %s440 = scalar_lea.vmem [#allocation1], %s439
        // Predicated region
        $region139: #{custom-call.11} parent=137 // pred_check
          %p441 = pneg %p40
        $region140: #{custom-call.11} parent=137 // pred_check_branch
          %443 = sbr.rel (%p441) target = $region142
        $region141: #{custom-call.11} parent=137 // pred_region
          %s444 = sand.u32 %s25, 1
          %s445 = scalar_lea.sflag [#allocation4], %s444
          %s446 = sand.u32 %s25, 1
          %s447 = smul.addr %s446, 2
          %s448 = scalar_lea.vmem [#allocation3], %s447
          %449 = dma.done %s445, 32
        $region142: #{custom-call.11} parent=137 // pred_fallthru
          _
        // Predicated region
        $region143: #{custom-call.11} parent=137 // pred_check
          %p450 = pneg %p68
        $region144: #{custom-call.11} parent=137 // pred_check_branch
          %452 = sbr.rel (%p450) target = $region146
        $region145: #{custom-call.11} parent=137 // pred_region
          %s453 = sand.u32 %s53, 1
          %s454 = sand.u32 %s53, 1
          %s455 = smul.addr %s454, 2
          %s456 = scalar_lea.vmem [#allocation6], %s455
        $region146: #{custom-call.11} parent=137 // pred_fallthru
          _
      $region138: #{custom-call.11} parent=5 // pred_fallthru
        _
    $region6: #{custom-call.11} parent=1 // loop_footer
      %s13 = sadd.s32 1, %s9
    $region7: #{custom-call.11} parent=1 // loop_footer_branch
      %8 = sbr.rel target = $region3
    $region8: #{custom-call.11} parent=1 // loop_exit
      _
    %457 = vsyncpa [#allocation4], 1
    %s458 = scalar_lea.sflag [#allocation4], 1
    %459 = vsyncpa %s458, 1

// kernel: custom-call.13
$region0: #{custom-call.13}
  %s0 = inlined_call_operand.vmem [shape: f32[2,1,6,6], index: 0, kind: input, shape index: {}]
  %s1 = inlined_call_operand.vmem [shape: f32[2,1,6,6], index: 1, kind: output, shape index: {}]
  $region1: #{custom-call.13} parent=0
    #allocation0 [shape = 'u8[8192]{0}', space=vmem, size = 0x2000, scoped, tag = 'operand span for operand 0']
    #allocation1 [shape = 'u8[8192]{0}', space=vmem, size = 0x2000, scoped, tag = 'operand span for operand 1']
    loop: start=0, step=1, limit=4
    $region2: #{custom-call.13} parent=1 // loop_pre_header
      _
    $region3: #{custom-call.13} parent=1 // loop_header
      %s3 = sphi 0, %s7
      %p4 = scmp.ge.s32.totalorder %s3, 4
      %s10 = sphi 0, %s36
      %s11 = sphi 0, %s32
      %s12 = sphi 0, %s28
      %s13 = sphi 0, %s24
      %s14 = sphi 0, %s10
      %s15 = sphi 0, %s11
      %s16 = sphi 0, %s12
      %s17 = sphi 0, %s13
      %s18 = sphi 0, %s14
      %s19 = sphi 0, %s15
      %s20 = sphi 0, %s16
      %s21 = sphi 0, %s17
    $region4: #{custom-call.13} parent=1 // loop_header_branch
      %6 = sbr.rel (%p4) target = $region8
    $region5: #{custom-call.13} parent=1 // loop_body
      %s8 = ssub.s32 %s3, 1
      %s9 = ssub.s32 %s3, 2
      %s22 = sadd.s32 1, %s13
      %p23 = scmp.ge.s32.totalorder %s22, 1
      %s24 = scalar_select %p23, 0, %s22
      %s25 = sadd.s32 1, %s12
      %s26 = scalar_select %p23, %s25, %s12
      %p27 = scmp.ge.s32.totalorder %s26, 1
      %s28 = scalar_select %p27, 0, %s26
      %s29 = sadd.s32 1, %s11
      %s30 = scalar_select %p27, %s29, %s11
      %p31 = scmp.ge.s32.totalorder %s30, 1
      %s32 = scalar_select %p31, 0, %s30
      %s33 = sadd.s32 1, %s10
      %s34 = scalar_select %p31, %s33, %s10
      %p35 = scmp.ge.s32.totalorder %s34, 2
      %s36 = scalar_select %p35, 0, %s34
      %p37 = scmp.le.s32.totalorder 1, %s3
      %p38 = scmp.lt.s32.totalorder %s3, 3
      %p39 = pnand %p37, %p38
      %p40 = pneg %p39
      // Predicated region
      $region9: #{custom-call.13} parent=5 // pred_check
        _
      $region10: #{custom-call.13} parent=5 // pred_check_branch
        %42 = sbr.rel (%p39) target = $region12
      $region11: #{custom-call.13} parent=5 // pred_region
        %s43 = ssub.s32 %s3, 1
      $region12: #{custom-call.13} parent=5 // pred_fallthru
        _
      %p44 = scmp.lt.s32.totalorder %s3, 2
      // Predicated region
      $region13: #{custom-call.13} parent=5 // pred_check
        %p45 = pneg %p44
      $region14: #{custom-call.13} parent=5 // pred_check_branch
        %47 = sbr.rel (%p45) target = $region16
      $region15: #{custom-call.13} parent=5 // pred_region
        %s48 = sand.u32 %s3, 1
        %s49 = sand.u32 %s3, 1
        %s50 = smul.addr %s49, 8
        %s51 = scalar_lea.vmem [#allocation0], %s50
        %s52 = sadd.s32 %s13, %s12
        %s53 = sadd.s32 %s52, %s11
        %s54 = sadd.s32 %s53, %s10
        %s55 = smul.addr %s54, 8
        %s56 = scalar_lea.vmem %s0, %s55
        // Predicated region
        $region17: #{custom-call.13} parent=15 // pred_check
          _
        $region18: #{custom-call.13} parent=15 // pred_check_branch
          %58 = sbr.rel (0) target = $region20
        $region19: #{custom-call.13} parent=15 // pred_region
          // Predicated region
          $region21: #{custom-call.13} parent=19 // pred_check
            _
          $region22: #{custom-call.13} parent=19 // pred_check_branch
            %60 = sbr.rel (0) target = $region24
          $region23: #{custom-call.13} parent=19 // pred_region
            // Predicated region
            $region36: #{custom-call.13} parent=23 // pred_check
              _
            $region37: #{custom-call.13} parent=23 // pred_check_branch
              %75 = sbr.rel (0) target = $region39
            $region38: #{custom-call.13} parent=23 // pred_region
              loop: start=0, step=1, limit=1
              $region40: #{custom-call.13} parent=38 // loop_pre_header
                _
              $region41: #{custom-call.13} parent=38 // loop_header
                %s77 = sphi 0, %s81
                %p78 = scmp.ge.s32.totalorder %s77, 1
                %s82 = sphi %s56, %s56
                %s83 = sphi %s51, %s51
              $region42: #{custom-call.13} parent=38 // loop_header_branch
                %80 = sbr.rel (%p78) target = $region46
              $region43: #{custom-call.13} parent=38 // loop_body
                %v84 = vld [vmem:[%s82] sm:$0xff]
                %85 = vst [vmem:[%s83] sm:$0xff] %v84
              $region44: #{custom-call.13} parent=38 // loop_footer
                %s81 = sadd.s32 1, %s77
              $region45: #{custom-call.13} parent=38 // loop_footer_branch
                %76 = sbr.rel target = $region41
              $region46: #{custom-call.13} parent=38 // loop_exit
                _
            $region39: #{custom-call.13} parent=23 // pred_fallthru
              _
            // Predicated region
            $region47: #{custom-call.13} parent=23 // pred_check
              _
            $region48: #{custom-call.13} parent=23 // pred_check_branch
              %87 = sbr.rel target = $region50
            $region49: #{custom-call.13} parent=23 // pred_region
              _
            $region50: #{custom-call.13} parent=23 // pred_fallthru
              _
          $region24: #{custom-call.13} parent=19 // pred_fallthru
            _
          // Predicated region
          $region25: #{custom-call.13} parent=19 // pred_check
            _
          $region26: #{custom-call.13} parent=19 // pred_check_branch
            %62 = sbr.rel target = $region28
          $region27: #{custom-call.13} parent=19 // pred_region
            loop: start=0, step=1, limit=1
            $region29: #{custom-call.13} parent=27 // loop_pre_header
              _
            $region30: #{custom-call.13} parent=27 // loop_header
              %s65 = sphi 0, %s69
              %p66 = scmp.ge.s32.totalorder %s65, 1
              %s70 = sphi %s56, %s56
              %s71 = sphi %s51, %s51
            $region31: #{custom-call.13} parent=27 // loop_header_branch
              %68 = sbr.rel (%p66) target = $region35
            $region32: #{custom-call.13} parent=27 // loop_body
              %v72 = vld [vmem:[%s70] sm:$0xff]
              %73 = vst [vmem:[%s71] sm:$0xff] %v72
            $region33: #{custom-call.13} parent=27 // loop_footer
              %s69 = sadd.s32 1, %s65
            $region34: #{custom-call.13} parent=27 // loop_footer_branch
              %64 = sbr.rel target = $region30
            $region35: #{custom-call.13} parent=27 // loop_exit
              _
          $region28: #{custom-call.13} parent=19 // pred_fallthru
            _
        $region20: #{custom-call.13} parent=15 // pred_fallthru
          _
        %88 = vnop
      $region16: #{custom-call.13} parent=5 // pred_fallthru
        _
      %p89 = scmp.le.s32.totalorder 1, %s3
      %p90 = scmp.lt.s32.totalorder %s3, 3
      %p91 = pnand %p89, %p90
      %p92 = pneg %p91
      // Predicated region
      $region51: #{custom-call.13} parent=5 // pred_check
        _
      $region52: #{custom-call.13} parent=5 // pred_check_branch
        %94 = sbr.rel (%p91) target = $region54
      $region53: #{custom-call.13} parent=5 // pred_region
        #allocation2 [shape = 'f32[6,6]{1,0}', space=vmem, size = 0x1000, scoped, tag = 'rescaled input a']
        %s95 = ssub.s32 %s3, 1
        %s96 = sand.u32 %s8, 1
        %s97 = sand.u32 %s8, 1
        %s98 = smul.addr %s97, 8
        %s99 = scalar_lea.vmem [#allocation0], %s98
        %s100 = sand.u32 %s8, 1
        %s101 = sand.u32 %s8, 1
        %s102 = smul.addr %s101, 8
        %s103 = scalar_lea.vmem [#allocation0], %s102
        %s104 = sand.u32 %s8, 1
        %s105 = sand.u32 %s8, 1
        %s106 = smul.addr %s105, 8
        %s107 = scalar_lea.vmem [#allocation1], %s106
        %v108 = vlaneseq
        %v109 = vand.u32 %v108, 127
        %vm110 = vcmp.lt.s32.totalorder %v109, 6
        %v111 = vlaneseq
        %v112 = vshrl.u32 %v111, 7
        %vm114 = vcmp.eq.s32.totalorder %v112, %v109
        %v115 = vld [vmem:[%s99] sm:$0xff]
        %v116 = vsel %vm114, %v115, 0.0
        %117 = vadd.xlane.f32.xlu0 %v116
        %v118 = vpop.xlane.xlu0 %117
        %vm119 = vcmp.ge.s32.totalorder %v112, %v109
        %vm120 = vmand %vm119, %vm110
        %v121 = vsel %vm120, %v115, 0.0
        %v122 = vrcp.pop %v118
        %v123 = vmul.f32 %v121, %v122
        %124 = vst [vmem:[#allocation2] sm:$0xff] %v123
        %v125 = vlaneseq
        %v126 = vand.u32 %v125, 127
        %v127 = vlaneseq
        %v128 = vshrl.u32 %v127, 7
        %vm130 = vcmp.eq.s32.totalorder %v126, %v128
        %v131 = vlaneseq
        %v132 = vand.u32 %v131, 127
        %vm133 = vcmp.eq.s32.totalorder %v132, 0
        %v134 = vsel %vm133, 1.0, -1.0
        %v135 = vsel %vm130, %v134, 0.0
        %s136 = scalar_lea.vmem [#allocation2], 1
        %v137 = vld [vmem:[%s136] ss:$0 sm:$0xff]
        %v138 = vxor.u32 %v137, 2147483648
        %v139 = vlaneseq
        %v140 = vand.u32 %v139, 127
        %vm141 = vcmp.eq.s32.totalorder %v140, 1
        %v142 = vmul.f32 %v138, %v135
        %143 = vadd.xlane.f32.xlu0 %v142
        %v144 = vpop.xlane.xlu0 %143
        %v145 = vsel %vm141, %v144, %v135
        %s146 = scalar_lea.vmem [#allocation2], 2
        %v147 = vld [vmem:[%s146] ss:$0 sm:$0xff]
        %v148 = vxor.u32 %v147, 2147483648
        %v149 = vlaneseq
        %v150 = vand.u32 %v149, 127
        %vm151 = vcmp.eq.s32.totalorder %v150, 2
        %v152 = vmul.f32 %v148, %v145
        %153 = vadd.xlane.f32.xlu0 %v152
        %v154 = vpop.xlane.xlu0 %153
        %v155 = vsel %vm151, %v154, %v145
        %s156 = scalar_lea.vmem [#allocation2], 3
        %v157 = vld [vmem:[%s156] ss:$0 sm:$0xff]
        %v158 = vxor.u32 %v157, 2147483648
        %v159 = vlaneseq
        %v160 = vand.u32 %v159, 127
        %vm161 = vcmp.eq.s32.totalorder %v160, 3
        %v162 = vmul.f32 %v158, %v155
        %163 = vadd.xlane.f32.xlu0 %v162
        %v164 = vpop.xlane.xlu0 %163
        %v165 = vsel %vm161, %v164, %v155
        %s166 = scalar_lea.vmem [#allocation2], 4
        %v167 = vld [vmem:[%s166] ss:$0 sm:$0xff]
        %v168 = vxor.u32 %v167, 2147483648
        %v169 = vlaneseq
        %v170 = vand.u32 %v169, 127
        %vm171 = vcmp.eq.s32.totalorder %v170, 4
        %v172 = vmul.f32 %v168, %v165
        %173 = vadd.xlane.f32.xlu0 %v172
        %v174 = vpop.xlane.xlu0 %173
        %v175 = vsel %vm171, %v174, %v165
        %s176 = scalar_lea.vmem [#allocation2], 5
        %v177 = vld [vmem:[%s176] ss:$0 sm:$0xff]
        %v178 = vxor.u32 %v177, 2147483648
        %v179 = vlaneseq
        %v180 = vand.u32 %v179, 127
        %vm181 = vcmp.eq.s32.totalorder %v180, 5
        %v182 = vmul.f32 %v178, %v175
        %183 = vadd.xlane.f32.xlu0 %v182
        %v184 = vpop.xlane.xlu0 %183
        %v185 = vsel %vm181, %v184, %v175
        %v186 = vrcp.pop %v118
        %v187 = vmul.f32 %v185, %v186
        %vm188 = vweird.f32 %v118
        %v189 = vsel %vm188, %v185, %v187
        %190 = vst [vmem:[%s107] sm:$0xff] %v189
        %s191 = sand.u32 %s8, 1
        %s192 = sand.u32 %s8, 1
        %s193 = smul.addr %s192, 8
        %s194 = scalar_lea.vmem [#allocation1], %s193
        %s195 = sadd.s32 %s17, %s16
        %s196 = sadd.s32 %s195, %s15
        %s197 = sadd.s32 %s196, %s14
        %s198 = smul.addr %s197, 8
        %s199 = scalar_lea.vmem %s1, %s198
        // Predicated region
        $region55: #{custom-call.13} parent=53 // pred_check
          _
        $region56: #{custom-call.13} parent=53 // pred_check_branch
          %201 = sbr.rel (0) target = $region58
        $region57: #{custom-call.13} parent=53 // pred_region
          // Predicated region
          $region59: #{custom-call.13} parent=57 // pred_check
            _
          $region60: #{custom-call.13} parent=57 // pred_check_branch
            %203 = sbr.rel (0) target = $region62
          $region61: #{custom-call.13} parent=57 // pred_region
            // Predicated region
            $region74: #{custom-call.13} parent=61 // pred_check
              _
            $region75: #{custom-call.13} parent=61 // pred_check_branch
              %218 = sbr.rel (0) target = $region77
            $region76: #{custom-call.13} parent=61 // pred_region
              loop: start=0, step=1, limit=1
              $region78: #{custom-call.13} parent=76 // loop_pre_header
                _
              $region79: #{custom-call.13} parent=76 // loop_header
                %s220 = sphi 0, %s224
                %p221 = scmp.ge.s32.totalorder %s220, 1
                %s225 = sphi %s194, %s194
                %s226 = sphi %s199, %s199
              $region80: #{custom-call.13} parent=76 // loop_header_branch
                %223 = sbr.rel (%p221) target = $region84
              $region81: #{custom-call.13} parent=76 // loop_body
                %v227 = vld [vmem:[%s225] sm:$0xff]
                %228 = vst [vmem:[%s226] sm:$0xff] %v227
              $region82: #{custom-call.13} parent=76 // loop_footer
                %s224 = sadd.s32 1, %s220
              $region83: #{custom-call.13} parent=76 // loop_footer_branch
                %219 = sbr.rel target = $region79
              $region84: #{custom-call.13} parent=76 // loop_exit
                _
            $region77: #{custom-call.13} parent=61 // pred_fallthru
              _
            // Predicated region
            $region85: #{custom-call.13} parent=61 // pred_check
              _
            $region86: #{custom-call.13} parent=61 // pred_check_branch
              %230 = sbr.rel target = $region88
            $region87: #{custom-call.13} parent=61 // pred_region
              _
            $region88: #{custom-call.13} parent=61 // pred_fallthru
              _
          $region62: #{custom-call.13} parent=57 // pred_fallthru
            _
          // Predicated region
          $region63: #{custom-call.13} parent=57 // pred_check
            _
          $region64: #{custom-call.13} parent=57 // pred_check_branch
            %205 = sbr.rel target = $region66
          $region65: #{custom-call.13} parent=57 // pred_region
            loop: start=0, step=1, limit=1
            $region67: #{custom-call.13} parent=65 // loop_pre_header
              _
            $region68: #{custom-call.13} parent=65 // loop_header
              %s208 = sphi 0, %s212
              %p209 = scmp.ge.s32.totalorder %s208, 1
              %s213 = sphi %s194, %s194
              %s214 = sphi %s199, %s199
            $region69: #{custom-call.13} parent=65 // loop_header_branch
              %211 = sbr.rel (%p209) target = $region73
            $region70: #{custom-call.13} parent=65 // loop_body
              %v215 = vld [vmem:[%s213] sm:$0xff]
              %216 = vst [vmem:[%s214] sm:$0xff] %v215
            $region71: #{custom-call.13} parent=65 // loop_footer
              %s212 = sadd.s32 1, %s208
            $region72: #{custom-call.13} parent=65 // loop_footer_branch
              %207 = sbr.rel target = $region68
            $region73: #{custom-call.13} parent=65 // loop_exit
              _
          $region66: #{custom-call.13} parent=57 // pred_fallthru
            _
        $region58: #{custom-call.13} parent=53 // pred_fallthru
          _
        %231 = vnop
      $region54: #{custom-call.13} parent=5 // pred_fallthru
        _
      %p232 = scmp.le.s32.totalorder 2, %s3
      // Predicated region
      $region89: #{custom-call.13} parent=5 // pred_check
        %p233 = pneg %p232
      $region90: #{custom-call.13} parent=5 // pred_check_branch
        %235 = sbr.rel (%p233) target = $region92
      $region91: #{custom-call.13} parent=5 // pred_region
        %s236 = ssub.s32 %s3, 2
        %s237 = sand.u32 %s9, 1
        %s238 = sand.u32 %s9, 1
        %s239 = smul.addr %s238, 8
        %s240 = scalar_lea.vmem [#allocation1], %s239
      $region92: #{custom-call.13} parent=5 // pred_fallthru
        _
    $region6: #{custom-call.13} parent=1 // loop_footer
      %s7 = sadd.s32 1, %s3
    $region7: #{custom-call.13} parent=1 // loop_footer_branch
      %2 = sbr.rel target = $region3
    $region8: #{custom-call.13} parent=1 // loop_exit
      _

// kernel: custom-call.12
$region0: #{custom-call.12}
  %s0 = inlined_call_operand.vmem [shape: f32[2,1,6,6], index: 0, kind: input, shape index: {}]
  %s1 = inlined_call_operand.vmem [shape: f32[2,1,6,6], index: 1, kind: output, shape index: {}]
  $region1: #{custom-call.12} parent=0
    #allocation0 [shape = 'u8[8192]{0}', space=vmem, size = 0x2000, scoped, tag = 'operand span for operand 0']
    #allocation1 [shape = 'u8[8192]{0}', space=vmem, size = 0x2000, scoped, tag = 'operand span for operand 1']
    loop: start=0, step=1, limit=4
    $region2: #{custom-call.12} parent=1 // loop_pre_header
      _
    $region3: #{custom-call.12} parent=1 // loop_header
      %s3 = sphi 0, %s7
      %p4 = scmp.ge.s32.totalorder %s3, 4
      %s10 = sphi 0, %s36
      %s11 = sphi 0, %s32
      %s12 = sphi 0, %s28
      %s13 = sphi 0, %s24
      %s14 = sphi 0, %s10
      %s15 = sphi 0, %s11
      %s16 = sphi 0, %s12
      %s17 = sphi 0, %s13
      %s18 = sphi 0, %s14
      %s19 = sphi 0, %s15
      %s20 = sphi 0, %s16
      %s21 = sphi 0, %s17
    $region4: #{custom-call.12} parent=1 // loop_header_branch
      %6 = sbr.rel (%p4) target = $region8
    $region5: #{custom-call.12} parent=1 // loop_body
      %s8 = ssub.s32 %s3, 1
      %s9 = ssub.s32 %s3, 2
      %s22 = sadd.s32 1, %s13
      %p23 = scmp.ge.s32.totalorder %s22, 1
      %s24 = scalar_select %p23, 0, %s22
      %s25 = sadd.s32 1, %s12
      %s26 = scalar_select %p23, %s25, %s12
      %p27 = scmp.ge.s32.totalorder %s26, 1
      %s28 = scalar_select %p27, 0, %s26
      %s29 = sadd.s32 1, %s11
      %s30 = scalar_select %p27, %s29, %s11
      %p31 = scmp.ge.s32.totalorder %s30, 1
      %s32 = scalar_select %p31, 0, %s30
      %s33 = sadd.s32 1, %s10
      %s34 = scalar_select %p31, %s33, %s10
      %p35 = scmp.ge.s32.totalorder %s34, 2
      %s36 = scalar_select %p35, 0, %s34
      %p37 = scmp.le.s32.totalorder 1, %s3
      %p38 = scmp.lt.s32.totalorder %s3, 3
      %p39 = pnand %p37, %p38
      %p40 = pneg %p39
      // Predicated region
      $region9: #{custom-call.12} parent=5 // pred_check
        _
      $region10: #{custom-call.12} parent=5 // pred_check_branch
        %42 = sbr.rel (%p39) target = $region12
      $region11: #{custom-call.12} parent=5 // pred_region
        %s43 = ssub.s32 %s3, 1
      $region12: #{custom-call.12} parent=5 // pred_fallthru
        _
      %p44 = scmp.lt.s32.totalorder %s3, 2
      // Predicated region
      $region13: #{custom-call.12} parent=5 // pred_check
        %p45 = pneg %p44
      $region14: #{custom-call.12} parent=5 // pred_check_branch
        %47 = sbr.rel (%p45) target = $region16
      $region15: #{custom-call.12} parent=5 // pred_region
        %s48 = sand.u32 %s3, 1
        %s49 = sand.u32 %s3, 1
        %s50 = smul.addr %s49, 8
        %s51 = scalar_lea.vmem [#allocation0], %s50
        %s52 = sadd.s32 %s13, %s12
        %s53 = sadd.s32 %s52, %s11
        %s54 = sadd.s32 %s53, %s10
        %s55 = smul.addr %s54, 8
        %s56 = scalar_lea.vmem %s0, %s55
        // Predicated region
        $region17: #{custom-call.12} parent=15 // pred_check
          _
        $region18: #{custom-call.12} parent=15 // pred_check_branch
          %58 = sbr.rel (0) target = $region20
        $region19: #{custom-call.12} parent=15 // pred_region
          // Predicated region
          $region21: #{custom-call.12} parent=19 // pred_check
            _
          $region22: #{custom-call.12} parent=19 // pred_check_branch
            %60 = sbr.rel (0) target = $region24
          $region23: #{custom-call.12} parent=19 // pred_region
            // Predicated region
            $region36: #{custom-call.12} parent=23 // pred_check
              _
            $region37: #{custom-call.12} parent=23 // pred_check_branch
              %75 = sbr.rel (0) target = $region39
            $region38: #{custom-call.12} parent=23 // pred_region
              loop: start=0, step=1, limit=1
              $region40: #{custom-call.12} parent=38 // loop_pre_header
                _
              $region41: #{custom-call.12} parent=38 // loop_header
                %s77 = sphi 0, %s81
                %p78 = scmp.ge.s32.totalorder %s77, 1
                %s82 = sphi %s56, %s56
                %s83 = sphi %s51, %s51
              $region42: #{custom-call.12} parent=38 // loop_header_branch
                %80 = sbr.rel (%p78) target = $region46
              $region43: #{custom-call.12} parent=38 // loop_body
                %v84 = vld [vmem:[%s82] sm:$0xff]
                %85 = vst [vmem:[%s83] sm:$0xff] %v84
              $region44: #{custom-call.12} parent=38 // loop_footer
                %s81 = sadd.s32 1, %s77
              $region45: #{custom-call.12} parent=38 // loop_footer_branch
                %76 = sbr.rel target = $region41
              $region46: #{custom-call.12} parent=38 // loop_exit
                _
            $region39: #{custom-call.12} parent=23 // pred_fallthru
              _
            // Predicated region
            $region47: #{custom-call.12} parent=23 // pred_check
              _
            $region48: #{custom-call.12} parent=23 // pred_check_branch
              %87 = sbr.rel target = $region50
            $region49: #{custom-call.12} parent=23 // pred_region
              _
            $region50: #{custom-call.12} parent=23 // pred_fallthru
              _
          $region24: #{custom-call.12} parent=19 // pred_fallthru
            _
          // Predicated region
          $region25: #{custom-call.12} parent=19 // pred_check
            _
          $region26: #{custom-call.12} parent=19 // pred_check_branch
            %62 = sbr.rel target = $region28
          $region27: #{custom-call.12} parent=19 // pred_region
            loop: start=0, step=1, limit=1
            $region29: #{custom-call.12} parent=27 // loop_pre_header
              _
            $region30: #{custom-call.12} parent=27 // loop_header
              %s65 = sphi 0, %s69
              %p66 = scmp.ge.s32.totalorder %s65, 1
              %s70 = sphi %s56, %s56
              %s71 = sphi %s51, %s51
            $region31: #{custom-call.12} parent=27 // loop_header_branch
              %68 = sbr.rel (%p66) target = $region35
            $region32: #{custom-call.12} parent=27 // loop_body
              %v72 = vld [vmem:[%s70] sm:$0xff]
              %73 = vst [vmem:[%s71] sm:$0xff] %v72
            $region33: #{custom-call.12} parent=27 // loop_footer
              %s69 = sadd.s32 1, %s65
            $region34: #{custom-call.12} parent=27 // loop_footer_branch
              %64 = sbr.rel target = $region30
            $region35: #{custom-call.12} parent=27 // loop_exit
              _
          $region28: #{custom-call.12} parent=19 // pred_fallthru
            _
        $region20: #{custom-call.12} parent=15 // pred_fallthru
          _
        %88 = vnop
      $region16: #{custom-call.12} parent=5 // pred_fallthru
        _
      %p89 = scmp.le.s32.totalorder 1, %s3
      %p90 = scmp.lt.s32.totalorder %s3, 3
      %p91 = pnand %p89, %p90
      %p92 = pneg %p91
      // Predicated region
      $region51: #{custom-call.12} parent=5 // pred_check
        _
      $region52: #{custom-call.12} parent=5 // pred_check_branch
        %94 = sbr.rel (%p91) target = $region54
      $region53: #{custom-call.12} parent=5 // pred_region
        #allocation2 [shape = 'f32[6,6]{1,0}', space=vmem, size = 0x1000, scoped, tag = 'rescaled input a']
        %s95 = ssub.s32 %s3, 1
        %s96 = sand.u32 %s8, 1
        %s97 = sand.u32 %s8, 1
        %s98 = smul.addr %s97, 8
        %s99 = scalar_lea.vmem [#allocation0], %s98
        %s100 = sand.u32 %s8, 1
        %s101 = sand.u32 %s8, 1
        %s102 = smul.addr %s101, 8
        %s103 = scalar_lea.vmem [#allocation0], %s102
        %s104 = sand.u32 %s8, 1
        %s105 = sand.u32 %s8, 1
        %s106 = smul.addr %s105, 8
        %s107 = scalar_lea.vmem [#allocation1], %s106
        %v108 = vlaneseq
        %v109 = vand.u32 %v108, 127
        %vm110 = vcmp.lt.s32.totalorder %v109, 6
        %v111 = vlaneseq
        %v112 = vshrl.u32 %v111, 7
        %vm114 = vcmp.eq.s32.totalorder %v112, %v109
        %v115 = vld [vmem:[%s99] sm:$0xff]
        %v116 = vsel %vm114, %v115, 0.0
        %117 = vadd.xlane.f32.xlu0 %v116
        %v118 = vpop.xlane.xlu0 %117
        %vm119 = vcmp.le.s32.totalorder %v112, %v109
        %vm120 = vmand %vm119, %vm110
        %v121 = vsel %vm120, %v115, 0.0
        %v122 = vrcp.pop %v118
        %v123 = vmul.f32 %v121, %v122
        %124 = vst [vmem:[#allocation2] sm:$0xff] %v123
        %v125 = vlaneseq
        %v126 = vand.u32 %v125, 127
        %v127 = vlaneseq
        %v128 = vshrl.u32 %v127, 7
        %vm130 = vcmp.eq.s32.totalorder %v126, %v128
        %v131 = vlaneseq
        %v132 = vand.u32 %v131, 127
        %vm133 = vcmp.eq.s32.totalorder %v132, 5
        %v134 = vsel %vm133, 1.0, -1.0
        %v135 = vsel %vm130, %v134, 0.0
        %s136 = scalar_lea.vmem [#allocation2], 4
        %v137 = vld [vmem:[%s136] ss:$0 sm:$0xff]
        %v138 = vxor.u32 %v137, 2147483648
        %v139 = vlaneseq
        %v140 = vand.u32 %v139, 127
        %vm141 = vcmp.eq.s32.totalorder %v140, 4
        %v142 = vmul.f32 %v138, %v135
        %143 = vadd.xlane.f32.xlu0 %v142
        %v144 = vpop.xlane.xlu0 %143
        %v145 = vsel %vm141, %v144, %v135
        %s146 = scalar_lea.vmem [#allocation2], 3
        %v147 = vld [vmem:[%s146] ss:$0 sm:$0xff]
        %v148 = vxor.u32 %v147, 2147483648
        %v149 = vlaneseq
        %v150 = vand.u32 %v149, 127
        %vm151 = vcmp.eq.s32.totalorder %v150, 3
        %v152 = vmul.f32 %v148, %v145
        %153 = vadd.xlane.f32.xlu0 %v152
        %v154 = vpop.xlane.xlu0 %153
        %v155 = vsel %vm151, %v154, %v145
        %s156 = scalar_lea.vmem [#allocation2], 2
        %v157 = vld [vmem:[%s156] ss:$0 sm:$0xff]
        %v158 = vxor.u32 %v157, 2147483648
        %v159 = vlaneseq
        %v160 = vand.u32 %v159, 127
        %vm161 = vcmp.eq.s32.totalorder %v160, 2
        %v162 = vmul.f32 %v158, %v155
        %163 = vadd.xlane.f32.xlu0 %v162
        %v164 = vpop.xlane.xlu0 %163
        %v165 = vsel %vm161, %v164, %v155
        %s166 = scalar_lea.vmem [#allocation2], 1
        %v167 = vld [vmem:[%s166] ss:$0 sm:$0xff]
        %v168 = vxor.u32 %v167, 2147483648
        %v169 = vlaneseq
        %v170 = vand.u32 %v169, 127
        %vm171 = vcmp.eq.s32.totalorder %v170, 1
        %v172 = vmul.f32 %v168, %v165
        %173 = vadd.xlane.f32.xlu0 %v172
        %v174 = vpop.xlane.xlu0 %173
        %v175 = vsel %vm171, %v174, %v165
        %v176 = vld [vmem:[#allocation2] ss:$0 sm:$0xff]
        %v177 = vxor.u32 %v176, 2147483648
        %v178 = vlaneseq
        %v179 = vand.u32 %v178, 127
        %vm180 = vcmp.eq.s32.totalorder %v179, 0
        %v181 = vmul.f32 %v177, %v175
        %182 = vadd.xlane.f32.xlu0 %v181
        %v183 = vpop.xlane.xlu0 %182
        %v184 = vsel %vm180, %v183, %v175
        %v185 = vrcp.pop %v118
        %v186 = vmul.f32 %v184, %v185
        %vm187 = vweird.f32 %v118
        %v188 = vsel %vm187, %v184, %v186
        %189 = vst [vmem:[%s107] sm:$0xff] %v188
        %s190 = sand.u32 %s8, 1
        %s191 = sand.u32 %s8, 1
        %s192 = smul.addr %s191, 8
        %s193 = scalar_lea.vmem [#allocation1], %s192
        %s194 = sadd.s32 %s17, %s16
        %s195 = sadd.s32 %s194, %s15
        %s196 = sadd.s32 %s195, %s14
        %s197 = smul.addr %s196, 8
        %s198 = scalar_lea.vmem %s1, %s197
        // Predicated region
        $region55: #{custom-call.12} parent=53 // pred_check
          _
        $region56: #{custom-call.12} parent=53 // pred_check_branch
          %200 = sbr.rel (0) target = $region58
        $region57: #{custom-call.12} parent=53 // pred_region
          // Predicated region
          $region59: #{custom-call.12} parent=57 // pred_check
            _
          $region60: #{custom-call.12} parent=57 // pred_check_branch
            %202 = sbr.rel (0) target = $region62
          $region61: #{custom-call.12} parent=57 // pred_region
            // Predicated region
            $region74: #{custom-call.12} parent=61 // pred_check
              _
            $region75: #{custom-call.12} parent=61 // pred_check_branch
              %217 = sbr.rel (0) target = $region77
            $region76: #{custom-call.12} parent=61 // pred_region
              loop: start=0, step=1, limit=1
              $region78: #{custom-call.12} parent=76 // loop_pre_header
                _
              $region79: #{custom-call.12} parent=76 // loop_header
                %s219 = sphi 0, %s223
                %p220 = scmp.ge.s32.totalorder %s219, 1
                %s224 = sphi %s193, %s193
                %s225 = sphi %s198, %s198
              $region80: #{custom-call.12} parent=76 // loop_header_branch
                %222 = sbr.rel (%p220) target = $region84
              $region81: #{custom-call.12} parent=76 // loop_body
                %v226 = vld [vmem:[%s224] sm:$0xff]
                %227 = vst [vmem:[%s225] sm:$0xff] %v226
              $region82: #{custom-call.12} parent=76 // loop_footer
                %s223 = sadd.s32 1, %s219
              $region83: #{custom-call.12} parent=76 // loop_footer_branch
                %218 = sbr.rel target = $region79
              $region84: #{custom-call.12} parent=76 // loop_exit
                _
            $region77: #{custom-call.12} parent=61 // pred_fallthru
              _
            // Predicated region
            $region85: #{custom-call.12} parent=61 // pred_check
              _
            $region86: #{custom-call.12} parent=61 // pred_check_branch
              %229 = sbr.rel target = $region88
            $region87: #{custom-call.12} parent=61 // pred_region
              _
            $region88: #{custom-call.12} parent=61 // pred_fallthru
              _
          $region62: #{custom-call.12} parent=57 // pred_fallthru
            _
          // Predicated region
          $region63: #{custom-call.12} parent=57 // pred_check
            _
          $region64: #{custom-call.12} parent=57 // pred_check_branch
            %204 = sbr.rel target = $region66
          $region65: #{custom-call.12} parent=57 // pred_region
            loop: start=0, step=1, limit=1
            $region67: #{custom-call.12} parent=65 // loop_pre_header
              _
            $region68: #{custom-call.12} parent=65 // loop_header
              %s207 = sphi 0, %s211
              %p208 = scmp.ge.s32.totalorder %s207, 1
              %s212 = sphi %s193, %s193
              %s213 = sphi %s198, %s198
            $region69: #{custom-call.12} parent=65 // loop_header_branch
              %210 = sbr.rel (%p208) target = $region73
            $region70: #{custom-call.12} parent=65 // loop_body
              %v214 = vld [vmem:[%s212] sm:$0xff]
              %215 = vst [vmem:[%s213] sm:$0xff] %v214
            $region71: #{custom-call.12} parent=65 // loop_footer
              %s211 = sadd.s32 1, %s207
            $region72: #{custom-call.12} parent=65 // loop_footer_branch
              %206 = sbr.rel target = $region68
            $region73: #{custom-call.12} parent=65 // loop_exit
              _
          $region66: #{custom-call.12} parent=57 // pred_fallthru
            _
        $region58: #{custom-call.12} parent=53 // pred_fallthru
          _
        %230 = vnop
      $region54: #{custom-call.12} parent=5 // pred_fallthru
        _
      %p231 = scmp.le.s32.totalorder 2, %s3
      // Predicated region
      $region89: #{custom-call.12} parent=5 // pred_check
        %p232 = pneg %p231
      $region90: #{custom-call.12} parent=5 // pred_check_branch
        %234 = sbr.rel (%p232) target = $region92
      $region91: #{custom-call.12} parent=5 // pred_region
        %s235 = ssub.s32 %s3, 2
        %s236 = sand.u32 %s9, 1
        %s237 = sand.u32 %s9, 1
        %s238 = smul.addr %s237, 8
        %s239 = scalar_lea.vmem [#allocation1], %s238
      $region92: #{custom-call.12} parent=5 // pred_fallthru
        _
    $region6: #{custom-call.12} parent=1 // loop_footer
      %s7 = sadd.s32 1, %s3
    $region7: #{custom-call.12} parent=1 // loop_footer_branch
      %2 = sbr.rel target = $region3
    $region8: #{custom-call.12} parent=1 // loop_exit
      _

// kernel: pointnetlk_forward.1
$region0: #{pointnetlk_forward.1}
  #allocation0 [shape = 'u32[]', space=smem, size = 0x4, offset = 0x4, fixed_abs, tag = 'smem constant byte address 0x4 - core index']
  #allocation1 [shape = 'u32[144,128]{1,0:T(1,128)}', space=vmem, size = 0x12000, scoped, tag = 'internal scratch']
  %s0 = inlined_call_operand.vmem [shape: f32[256,8], index: 0, kind: input, shape index: {}]
  %s1 = inlined_call_operand.vmem [shape: f32[520,128], index: 1, kind: input, shape index: {}]
  %s2 = inlined_call_operand.vmem [shape: f32[8,128], index: 2, kind: input, shape index: {}]
  %s3 = inlined_call_operand.vmem [shape: f32[16,128], index: 3, kind: output, shape index: {}]
  %s4 = sld [smem:[#allocation0]]
  $region22: #{pointnetlk_forward.1} parent=0
    _
  %s6 = ssub.s32 1, %s4
  %s7 = scalar_select 0, %s6, %s4
  // Predicated region
  $region2: #{pointnetlk_forward.1} parent=0 // pred_check
    _
  $region3: #{pointnetlk_forward.1} parent=0 // pred_check_branch
    %9 = sbr.rel (0) target = $region5
  $region4: #{pointnetlk_forward.1} parent=0 // pred_region
    _
  $region5: #{pointnetlk_forward.1} parent=0 // pred_fallthru
    _
  // Predicated region
  $region6: #{pointnetlk_forward.1} parent=0 // pred_check
    _
  $region7: #{pointnetlk_forward.1} parent=0 // pred_check_branch
    %11 = sbr.rel (0) target = $region9
  $region8: #{pointnetlk_forward.1} parent=0 // pred_region
    _
  $region9: #{pointnetlk_forward.1} parent=0 // pred_fallthru
    _
  // Predicated region
  $region10: #{pointnetlk_forward.1} parent=0 // pred_check
    _
  $region11: #{pointnetlk_forward.1} parent=0 // pred_check_branch
    %13 = sbr.rel (0) target = $region13
  $region12: #{pointnetlk_forward.1} parent=0 // pred_region
    _
  $region13: #{pointnetlk_forward.1} parent=0 // pred_fallthru
    _
  %v14 = vld [vmem:[%s0] sm:$0xff]
  %v15 = vld [vmem:[%s0 + $0x8] sm:$0xff]
  %v16 = vld [vmem:[%s0 + $0x10] sm:$0xff]
  %v17 = vld [vmem:[%s0 + $0x18] sm:$0xff]
  %v18 = vld [vmem:[%s0 + $0x20] sm:$0xff]
  %v19 = vld [vmem:[%s0 + $0x28] sm:$0xff]
  %v20 = vld [vmem:[%s0 + $0x30] sm:$0xff]
  %v21 = vld [vmem:[%s0 + $0x38] sm:$0xff]
  %v22 = vld [vmem:[%s0 + $0x40] sm:$0xff]
  %v23 = vld [vmem:[%s0 + $0x48] sm:$0xff]
  %v24 = vld [vmem:[%s0 + $0x50] sm:$0xff]
  %v25 = vld [vmem:[%s0 + $0x58] sm:$0xff]
  %v26 = vld [vmem:[%s0 + $0x60] sm:$0xff]
  %v27 = vld [vmem:[%s0 + $0x68] sm:$0xff]
  %v28 = vld [vmem:[%s0 + $0x70] sm:$0xff]
  %v29 = vld [vmem:[%s0 + $0x78] sm:$0xff]
  %v30 = vld [vmem:[%s0 + $0x80] sm:$0xff]
  %v31 = vld [vmem:[%s0 + $0x88] sm:$0xff]
  %v32 = vld [vmem:[%s0 + $0x90] sm:$0xff]
  %v33 = vld [vmem:[%s0 + $0x98] sm:$0xff]
  %v34 = vld [vmem:[%s0 + $0xa0] sm:$0xff]
  %v35 = vld [vmem:[%s0 + $0xa8] sm:$0xff]
  %v36 = vld [vmem:[%s0 + $0xb0] sm:$0xff]
  %v37 = vld [vmem:[%s0 + $0xb8] sm:$0xff]
  %v38 = vld [vmem:[%s0 + $0xc0] sm:$0xff]
  %v39 = vld [vmem:[%s0 + $0xc8] sm:$0xff]
  %v40 = vld [vmem:[%s0 + $0xd0] sm:$0xff]
  %v41 = vld [vmem:[%s0 + $0xd8] sm:$0xff]
  %v42 = vld [vmem:[%s0 + $0xe0] sm:$0xff]
  %v43 = vld [vmem:[%s0 + $0xe8] sm:$0xff]
  %v44 = vld [vmem:[%s0 + $0xf0] sm:$0xff]
  %v45 = vld [vmem:[%s0 + $0xf8] sm:$0xff]
  %v46 = vld [vmem:[%s1] sm:$0xff]
  %v47 = vld [vmem:[%s2] sm:$0x1]
  %v48 = vlaneseq
  %v49 = vshrl.u32 %v48, 7
  %v50 = vsub.s32 0, %v49
  %v51 = vrot.slane %v47, %v50
  %vm52 = vcmask 64512
  %v54 = vsel %vm52, %v14, 0
  %v57 = vsel %vm52, %v15, 0
  %v60 = vsel %vm52, %v16, 0
  %v63 = vsel %vm52, %v17, 0
  %v66 = vsel %vm52, %v18, 0
  %v69 = vsel %vm52, %v19, 0
  %v72 = vsel %vm52, %v20, 0
  %v75 = vsel %vm52, %v21, 0
  %v78 = vsel %vm52, %v22, 0
  %v81 = vsel %vm52, %v23, 0
  %v84 = vsel %vm52, %v24, 0
  %v87 = vsel %vm52, %v25, 0
  %v90 = vsel %vm52, %v26, 0
  %v93 = vsel %vm52, %v27, 0
  %v96 = vsel %vm52, %v28, 0
  %v99 = vsel %vm52, %v29, 0
  %v102 = vsel %vm52, %v30, 0
  %v105 = vsel %vm52, %v31, 0
  %v108 = vsel %vm52, %v32, 0
  %v111 = vsel %vm52, %v33, 0
  %v114 = vsel %vm52, %v34, 0
  %v117 = vsel %vm52, %v35, 0
  %v120 = vsel %vm52, %v36, 0
  %v123 = vsel %vm52, %v37, 0
  %v126 = vsel %vm52, %v38, 0
  %v129 = vsel %vm52, %v39, 0
  %v132 = vsel %vm52, %v40, 0
  %v135 = vsel %vm52, %v41, 0
  %v138 = vsel %vm52, %v42, 0
  %v141 = vsel %vm52, %v43, 0
  %v144 = vsel %vm52, %v44, 0
  %v147 = vsel %vm52, %v45, 0
  %149 = vmatprep.subr.mxu0 0.0
  %150 = vmatpush1.msra.mxu0 %v46
  %151 = vmatprep.subr.mxu0 0.0
  %152 = vmatpush1.msra.mxu0 0.0
  %153 = vmatprep.subr.mxu0 0.0
  %154 = vmatpush1.msra.mxu0 0.0
  %155 = vmatprep.subr.mxu0 0.0
  %156 = vmatpush1.msra.mxu0 0.0
  %157 = vmatprep.subr.mxu0 0.0
  %158 = vmatpush1.msra.mxu0 0.0
  %159 = vmatprep.subr.mxu0 0.0
  %160 = vmatpush1.msra.mxu0 0.0
  %161 = vmatprep.subr.mxu0 0.0
  %162 = vmatpush1.msra.mxu0 0.0
  %163 = vmatprep.subr.mxu0 0.0
  %164 = vmatpush1.msra.mxu0 0.0
  %165 = vmatprep.subr.mxu0 0.0
  %166 = vmatpush1.msra.mxu0 0.0
  %167 = vmatprep.subr.mxu0 0.0
  %168 = vmatpush1.msra.mxu0 0.0
  %169 = vmatprep.subr.mxu0 0.0
  %170 = vmatpush1.msra.mxu0 0.0
  %171 = vmatprep.subr.mxu0 0.0
  %172 = vmatpush1.msra.mxu0 0.0
  %173 = vmatprep.subr.mxu0 0.0
  %174 = vmatpush1.msra.mxu0 0.0
  %175 = vmatprep.subr.mxu0 0.0
  %176 = vmatpush1.msra.mxu0 0.0
  %177 = vmatprep.subr.mxu0 0.0
  %178 = vmatpush1.msra.mxu0 0.0
  %179 = vmatprep.subr.mxu0 0.0
  %180 = vmatpush1.msra.mxu0 0.0
  %181 = vmatprep.subr.mxu0 0.0
  %182 = vmatpush1.msra.mxu0 0.0
  %183 = vmatprep.subr.mxu0 0.0
  %184 = vmatpush1.msra.mxu0 0.0
  %185 = vmatprep.subr.mxu0 0.0
  %186 = vmatpush1.msra.mxu0 0.0
  %187 = vmatprep.subr.mxu0 0.0
  %188 = vmatpush1.msra.mxu0 0.0
  %189 = vmatprep.subr.mxu0 0.0
  %190 = vmatpush1.msra.mxu0 0.0
  %191 = vmatprep.subr.mxu0 0.0
  %192 = vmatpush1.msra.mxu0 0.0
  %193 = vmatprep.subr.mxu0 0.0
  %194 = vmatpush1.msra.mxu0 0.0
  %195 = vmatprep.subr.mxu0 0.0
  %196 = vmatpush1.msra.mxu0 0.0
  %197 = vmatprep.subr.mxu0 0.0
  %198 = vmatpush1.msra.mxu0 0.0
  %199 = vmatprep.subr.mxu0 0.0
  %200 = vmatpush1.msra.mxu0 0.0
  %201 = vmatprep.subr.mxu0 0.0
  %202 = vmatpush1.msra.mxu0 0.0
  %203 = vmatprep.subr.mxu0 0.0
  %204 = vmatpush1.msra.mxu0 0.0
  %205 = vmatprep.subr.mxu0 0.0
  %206 = vmatpush1.msra.mxu0 0.0
  %207 = vmatprep.subr.mxu0 0.0
  %208 = vmatpush1.msra.mxu0 0.0
  %209 = vmatprep.subr.mxu0 0.0
  %210 = vmatpush1.msra.mxu0 0.0
  %211 = vmatprep.subr.mxu0 0.0
  %212 = vmatpush1.msra.mxu0 0.0
  %213 = vmatprep.mubr.f32.mxu0 0.0
  %214 = vmatmul.mubr.f32.gmra.mrb[0].mxu0 %v54
  %v215 = vpop.f32.mrb[0].mxu0
  %v216 = vadd.f32 %v51, %v215
  %v217 = vpop.f32.mrb[0].mxu0
  %218 = vmatprep.mubr.f32.mxu0 0.0
  %219 = vmatmul.mubr.f32.gmra.mrb[0].mxu0 %v57
  %v220 = vpop.f32.mrb[0].mxu0
  %v221 = vadd.f32 %v51, %v220
  %v222 = vpop.f32.mrb[0].mxu0
  %223 = vmatprep.mubr.f32.mxu0 0.0
  %224 = vmatmul.mubr.f32.gmra.mrb[0].mxu0 %v60
  %v225 = vpop.f32.mrb[0].mxu0
  %v226 = vadd.f32 %v51, %v225
  %v227 = vpop.f32.mrb[0].mxu0
  %228 = vmatprep.mubr.f32.mxu0 0.0
  %229 = vmatmul.mubr.f32.gmra.mrb[0].mxu0 %v63
  %v230 = vpop.f32.mrb[0].mxu0
  %v231 = vadd.f32 %v51, %v230
  %v232 = vpop.f32.mrb[0].mxu0
  %233 = vmatprep.mubr.f32.mxu0 0.0
  %234 = vmatmul.mubr.f32.gmra.mrb[0].mxu0 %v66
  %v235 = vpop.f32.mrb[0].mxu0
  %v236 = vadd.f32 %v51, %v235
  %v237 = vpop.f32.mrb[0].mxu0
  %238 = vmatprep.mubr.f32.mxu0 0.0
  %239 = vmatmul.mubr.f32.gmra.mrb[0].mxu0 %v69
  %v240 = vpop.f32.mrb[0].mxu0
  %v241 = vadd.f32 %v51, %v240
  %v242 = vpop.f32.mrb[0].mxu0
  %243 = vmatprep.mubr.f32.mxu0 0.0
  %244 = vmatmul.mubr.f32.gmra.mrb[0].mxu0 %v72
  %v245 = vpop.f32.mrb[0].mxu0
  %v246 = vadd.f32 %v51, %v245
  %v247 = vpop.f32.mrb[0].mxu0
  %248 = vmatprep.mubr.f32.mxu0 0.0
  %249 = vmatmul.mubr.f32.gmra.mrb[0].mxu0 %v75
  %v250 = vpop.f32.mrb[0].mxu0
  %v251 = vadd.f32 %v51, %v250
  %v252 = vpop.f32.mrb[0].mxu0
  %253 = vmatprep.mubr.f32.mxu0 0.0
  %254 = vmatmul.mubr.f32.gmra.mrb[0].mxu0 %v78
  %v255 = vpop.f32.mrb[0].mxu0
  %v256 = vadd.f32 %v51, %v255
  %v257 = vpop.f32.mrb[0].mxu0
  %258 = vmatprep.mubr.f32.mxu0 0.0
  %259 = vmatmul.mubr.f32.gmra.mrb[0].mxu0 %v81
  %v260 = vpop.f32.mrb[0].mxu0
  %v261 = vadd.f32 %v51, %v260
  %v262 = vpop.f32.mrb[0].mxu0
  %263 = vmatprep.mubr.f32.mxu0 0.0
  %264 = vmatmul.mubr.f32.gmra.mrb[0].mxu0 %v84
  %v265 = vpop.f32.mrb[0].mxu0
  %v266 = vadd.f32 %v51, %v265
  %v267 = vpop.f32.mrb[0].mxu0
  %268 = vmatprep.mubr.f32.mxu0 0.0
  %269 = vmatmul.mubr.f32.gmra.mrb[0].mxu0 %v87
  %v270 = vpop.f32.mrb[0].mxu0
  %v271 = vadd.f32 %v51, %v270
  %v272 = vpop.f32.mrb[0].mxu0
  %273 = vmatprep.mubr.f32.mxu0 0.0
  %274 = vmatmul.mubr.f32.gmra.mrb[0].mxu0 %v90
  %v275 = vpop.f32.mrb[0].mxu0
  %v276 = vadd.f32 %v51, %v275
  %v277 = vpop.f32.mrb[0].mxu0
  %278 = vmatprep.mubr.f32.mxu0 0.0
  %279 = vmatmul.mubr.f32.gmra.mrb[0].mxu0 %v93
  %v280 = vpop.f32.mrb[0].mxu0
  %v281 = vadd.f32 %v51, %v280
  %v282 = vpop.f32.mrb[0].mxu0
  %283 = vmatprep.mubr.f32.mxu0 0.0
  %284 = vmatmul.mubr.f32.gmra.mrb[0].mxu0 %v96
  %v285 = vpop.f32.mrb[0].mxu0
  %v286 = vadd.f32 %v51, %v285
  %v287 = vpop.f32.mrb[0].mxu0
  %288 = vmatprep.mubr.f32.mxu0 0.0
  %289 = vmatmul.mubr.f32.gmra.mrb[0].mxu0 %v99
  %v290 = vpop.f32.mrb[0].mxu0
  %v291 = vadd.f32 %v51, %v290
  %v292 = vpop.f32.mrb[0].mxu0
  %293 = vmatprep.mubr.f32.mxu0 0.0
  %294 = vmatmul.mubr.f32.gmra.mrb[0].mxu0 %v102
  %v295 = vpop.f32.mrb[0].mxu0
  %v296 = vadd.f32 %v51, %v295
  %v297 = vpop.f32.mrb[0].mxu0
  %298 = vmatprep.mubr.f32.mxu0 0.0
  %299 = vmatmul.mubr.f32.gmra.mrb[0].mxu0 %v105
  %v300 = vpop.f32.mrb[0].mxu0
  %v301 = vadd.f32 %v51, %v300
  %v302 = vpop.f32.mrb[0].mxu0
  %303 = vmatprep.mubr.f32.mxu0 0.0
  %304 = vmatmul.mubr.f32.gmra.mrb[0].mxu0 %v108
  %v305 = vpop.f32.mrb[0].mxu0
  %v306 = vadd.f32 %v51, %v305
  %v307 = vpop.f32.mrb[0].mxu0
  %308 = vmatprep.mubr.f32.mxu0 0.0
  %309 = vmatmul.mubr.f32.gmra.mrb[0].mxu0 %v111
  %v310 = vpop.f32.mrb[0].mxu0
  %v311 = vadd.f32 %v51, %v310
  %v312 = vpop.f32.mrb[0].mxu0
  %313 = vmatprep.mubr.f32.mxu0 0.0
  %314 = vmatmul.mubr.f32.gmra.mrb[0].mxu0 %v114
  %v315 = vpop.f32.mrb[0].mxu0
  %v316 = vadd.f32 %v51, %v315
  %v317 = vpop.f32.mrb[0].mxu0
  %318 = vmatprep.mubr.f32.mxu0 0.0
  %319 = vmatmul.mubr.f32.gmra.mrb[0].mxu0 %v117
  %v320 = vpop.f32.mrb[0].mxu0
  %v321 = vadd.f32 %v51, %v320
  %v322 = vpop.f32.mrb[0].mxu0
  %323 = vmatprep.mubr.f32.mxu0 0.0
  %324 = vmatmul.mubr.f32.gmra.mrb[0].mxu0 %v120
  %v325 = vpop.f32.mrb[0].mxu0
  %v326 = vadd.f32 %v51, %v325
  %v327 = vpop.f32.mrb[0].mxu0
  %328 = vmatprep.mubr.f32.mxu0 0.0
  %329 = vmatmul.mubr.f32.gmra.mrb[0].mxu0 %v123
  %v330 = vpop.f32.mrb[0].mxu0
  %v331 = vadd.f32 %v51, %v330
  %v332 = vpop.f32.mrb[0].mxu0
  %333 = vmatprep.mubr.f32.mxu0 0.0
  %334 = vmatmul.mubr.f32.gmra.mrb[0].mxu0 %v126
  %v335 = vpop.f32.mrb[0].mxu0
  %v336 = vadd.f32 %v51, %v335
  %v337 = vpop.f32.mrb[0].mxu0
  %338 = vmatprep.mubr.f32.mxu0 0.0
  %339 = vmatmul.mubr.f32.gmra.mrb[0].mxu0 %v129
  %v340 = vpop.f32.mrb[0].mxu0
  %v341 = vadd.f32 %v51, %v340
  %v342 = vpop.f32.mrb[0].mxu0
  %343 = vmatprep.mubr.f32.mxu0 0.0
  %344 = vmatmul.mubr.f32.gmra.mrb[0].mxu0 %v132
  %v345 = vpop.f32.mrb[0].mxu0
  %v346 = vadd.f32 %v51, %v345
  %v347 = vpop.f32.mrb[0].mxu0
  %348 = vmatprep.mubr.f32.mxu0 0.0
  %349 = vmatmul.mubr.f32.gmra.mrb[0].mxu0 %v135
  %v350 = vpop.f32.mrb[0].mxu0
  %v351 = vadd.f32 %v51, %v350
  %v352 = vpop.f32.mrb[0].mxu0
  %353 = vmatprep.mubr.f32.mxu0 0.0
  %354 = vmatmul.mubr.f32.gmra.mrb[0].mxu0 %v138
  %v355 = vpop.f32.mrb[0].mxu0
  %v356 = vadd.f32 %v51, %v355
  %v357 = vpop.f32.mrb[0].mxu0
  %358 = vmatprep.mubr.f32.mxu0 0.0
  %359 = vmatmul.mubr.f32.gmra.mrb[0].mxu0 %v141
  %v360 = vpop.f32.mrb[0].mxu0
  %v361 = vadd.f32 %v51, %v360
  %v362 = vpop.f32.mrb[0].mxu0
  %363 = vmatprep.mubr.f32.mxu0 0.0
  %364 = vmatmul.mubr.f32.gmra.mrb[0].mxu0 %v144
  %v365 = vpop.f32.mrb[0].mxu0
  %v366 = vadd.f32 %v51, %v365
  %v367 = vpop.f32.mrb[0].mxu0
  %368 = vmatprep.mubr.f32.mxu0 0.0
  %369 = vmatmul.mubr.f32.gmra.mrb[0].mxu0 %v147
  %v370 = vpop.f32.mrb[0].mxu0
  %v371 = vadd.f32 %v51, %v370
  %v372 = vpop.f32.mrb[0].mxu0
  %373 = vdwg.mxu0
  %v374 = vmax.f32 %v216, 0.0
  %v375 = vmax.f32 %v221, 0.0
  %v376 = vmax.f32 %v226, 0.0
  %v377 = vmax.f32 %v231, 0.0
  %v378 = vmax.f32 %v236, 0.0
  %v379 = vmax.f32 %v241, 0.0
  %v380 = vmax.f32 %v246, 0.0
  %v381 = vmax.f32 %v251, 0.0
  %v382 = vmax.f32 %v256, 0.0
  %v383 = vmax.f32 %v261, 0.0
  %v384 = vmax.f32 %v266, 0.0
  %v385 = vmax.f32 %v271, 0.0
  %v386 = vmax.f32 %v276, 0.0
  %v387 = vmax.f32 %v281, 0.0
  %v388 = vmax.f32 %v286, 0.0
  %v389 = vmax.f32 %v291, 0.0
  %v390 = vmax.f32 %v296, 0.0
  %v391 = vmax.f32 %v301, 0.0
  %v392 = vmax.f32 %v306, 0.0
  %v393 = vmax.f32 %v311, 0.0
  %v394 = vmax.f32 %v316, 0.0
  %v395 = vmax.f32 %v321, 0.0
  %v396 = vmax.f32 %v326, 0.0
  %v397 = vmax.f32 %v331, 0.0
  %v398 = vmax.f32 %v336, 0.0
  %v399 = vmax.f32 %v341, 0.0
  %v400 = vmax.f32 %v346, 0.0
  %v401 = vmax.f32 %v351, 0.0
  %v402 = vmax.f32 %v356, 0.0
  %v403 = vmax.f32 %v361, 0.0
  %v404 = vmax.f32 %v366, 0.0
  %v405 = vmax.f32 %v371, 0.0
  %v406 = vld [vmem:[%s1 + $0x8] sm:$0xff]
  %v407 = vld [vmem:[%s1 + $0x10] sm:$0xff]
  %v408 = vld [vmem:[%s1 + $0x18] sm:$0xff]
  %v409 = vld [vmem:[%s1 + $0x20] sm:$0xff]
  %v410 = vld [vmem:[%s1 + $0x28] sm:$0xff]
  %v411 = vld [vmem:[%s1 + $0x30] sm:$0xff]
  %v412 = vld [vmem:[%s1 + $0x38] sm:$0xff]
  %v413 = vld [vmem:[%s1 + $0x40] sm:$0xff]
  %v414 = vld [vmem:[%s1 + $0x48] sm:$0xff]
  %v415 = vld [vmem:[%s1 + $0x50] sm:$0xff]
  %v416 = vld [vmem:[%s1 + $0x58] sm:$0xff]
  %v417 = vld [vmem:[%s1 + $0x60] sm:$0xff]
  %v418 = vld [vmem:[%s1 + $0x68] sm:$0xff]
  %v419 = vld [vmem:[%s1 + $0x70] sm:$0xff]
  %v420 = vld [vmem:[%s1 + $0x78] sm:$0xff]
  %v421 = vld [vmem:[%s1 + $0x80] sm:$0xff]
  %v422 = vld [vmem:[%s2 + $0x1] sm:$0x1]
  %v423 = vlaneseq
  %v424 = vshrl.u32 %v423, 7
  %v425 = vsub.s32 0, %v424
  %v426 = vrot.slane %v422, %v425
  %427 = vmatprep.subr.mxu0 0.0
  %428 = vmatpush1.msra.mxu0 %v406
  %429 = vmatprep.subr.mxu0 0.0
  %430 = vmatpush1.msra.mxu0 %v407
  %431 = vmatprep.subr.mxu0 0.0
  %432 = vmatpush1.msra.mxu0 %v408
  %433 = vmatprep.subr.mxu0 0.0
  %434 = vmatpush1.msra.mxu0 %v409
  %435 = vmatprep.subr.mxu0 0.0
  %436 = vmatpush1.msra.mxu0 %v410
  %437 = vmatprep.subr.mxu0 0.0
  %438 = vmatpush1.msra.mxu0 %v411
  %439 = vmatprep.subr.mxu0 0.0
  %440 = vmatpush1.msra.mxu0 %v412
  %441 = vmatprep.subr.mxu0 0.0
  %442 = vmatpush1.msra.mxu0 %v413
  %443 = vmatprep.subr.mxu0 0.0
  %444 = vmatpush1.msra.mxu0 %v414
  %445 = vmatprep.subr.mxu0 0.0
  %446 = vmatpush1.msra.mxu0 %v415
  %447 = vmatprep.subr.mxu0 0.0
  %448 = vmatpush1.msra.mxu0 %v416
  %449 = vmatprep.subr.mxu0 0.0
  %450 = vmatpush1.msra.mxu0 %v417
  %451 = vmatprep.subr.mxu0 0.0
  %452 = vmatpush1.msra.mxu0 %v418
  %453 = vmatprep.subr.mxu0 0.0
  %454 = vmatpush1.msra.mxu0 %v419
  %455 = vmatprep.subr.mxu0 0.0
  %456 = vmatpush1.msra.mxu0 %v420
  %457 = vmatprep.subr.mxu0 0.0
  %458 = vmatpush1.msra.mxu0 %v421
  %459 = vmatprep.subr.mxu0 0.0
  %460 = vmatpush1.msra.mxu0 0.0
  %461 = vmatprep.subr.mxu0 0.0
  %462 = vmatpush1.msra.mxu0 0.0
  %463 = vmatprep.subr.mxu0 0.0
  %464 = vmatpush1.msra.mxu0 0.0
  %465 = vmatprep.subr.mxu0 0.0
  %466 = vmatpush1.msra.mxu0 0.0
  %467 = vmatprep.subr.mxu0 0.0
  %468 = vmatpush1.msra.mxu0 0.0
  %469 = vmatprep.subr.mxu0 0.0
  %470 = vmatpush1.msra.mxu0 0.0
  %471 = vmatprep.subr.mxu0 0.0
  %472 = vmatpush1.msra.mxu0 0.0
  %473 = vmatprep.subr.mxu0 0.0
  %474 = vmatpush1.msra.mxu0 0.0
  %475 = vmatprep.subr.mxu0 0.0
  %476 = vmatpush1.msra.mxu0 0.0
  %477 = vmatprep.subr.mxu0 0.0
  %478 = vmatpush1.msra.mxu0 0.0
  %479 = vmatprep.subr.mxu0 0.0
  %480 = vmatpush1.msra.mxu0 0.0
  %481 = vmatprep.subr.mxu0 0.0
  %482 = vmatpush1.msra.mxu0 0.0
  %483 = vmatprep.subr.mxu0 0.0
  %484 = vmatpush1.msra.mxu0 0.0
  %485 = vmatprep.subr.mxu0 0.0
  %486 = vmatpush1.msra.mxu0 0.0
  %487 = vmatprep.subr.mxu0 0.0
  %488 = vmatpush1.msra.mxu0 0.0
  %489 = vmatprep.subr.mxu0 0.0
  %490 = vmatpush1.msra.mxu0 0.0
  %491 = vmatprep.mubr.f32.mxu0 0.0
  %492 = vmatmul.mubr.f32.gmra.mrb[0].mxu0 %v374
  %v493 = vpop.f32.mrb[0].mxu0
  %v494 = vadd.f32 %v426, %v493
  %v495 = vpop.f32.mrb[0].mxu0
  %496 = vmatprep.mubr.f32.mxu0 0.0
  %497 = vmatmul.mubr.f32.gmra.mrb[0].mxu0 %v375
  %v498 = vpop.f32.mrb[0].mxu0
  %v499 = vadd.f32 %v426, %v498
  %v500 = vpop.f32.mrb[0].mxu0
  %501 = vmatprep.mubr.f32.mxu0 0.0
  %502 = vmatmul.mubr.f32.gmra.mrb[0].mxu0 %v376
  %v503 = vpop.f32.mrb[0].mxu0
  %v504 = vadd.f32 %v426, %v503
  %v505 = vpop.f32.mrb[0].mxu0
  %506 = vmatprep.mubr.f32.mxu0 0.0
  %507 = vmatmul.mubr.f32.gmra.mrb[0].mxu0 %v377
  %v508 = vpop.f32.mrb[0].mxu0
  %v509 = vadd.f32 %v426, %v508
  %v510 = vpop.f32.mrb[0].mxu0
  %511 = vmatprep.mubr.f32.mxu0 0.0
  %512 = vmatmul.mubr.f32.gmra.mrb[0].mxu0 %v378
  %v513 = vpop.f32.mrb[0].mxu0
  %v514 = vadd.f32 %v426, %v513
  %v515 = vpop.f32.mrb[0].mxu0
  %516 = vmatprep.mubr.f32.mxu0 0.0
  %517 = vmatmul.mubr.f32.gmra.mrb[0].mxu0 %v379
  %v518 = vpop.f32.mrb[0].mxu0
  %v519 = vadd.f32 %v426, %v518
  %v520 = vpop.f32.mrb[0].mxu0
  %521 = vmatprep.mubr.f32.mxu0 0.0
  %522 = vmatmul.mubr.f32.gmra.mrb[0].mxu0 %v380
  %v523 = vpop.f32.mrb[0].mxu0
  %v524 = vadd.f32 %v426, %v523
  %v525 = vpop.f32.mrb[0].mxu0
  %526 = vmatprep.mubr.f32.mxu0 0.0
  %527 = vmatmul.mubr.f32.gmra.mrb[0].mxu0 %v381
  %v528 = vpop.f32.mrb[0].mxu0
  %v529 = vadd.f32 %v426, %v528
  %v530 = vpop.f32.mrb[0].mxu0
  %531 = vmatprep.mubr.f32.mxu0 0.0
  %532 = vmatmul.mubr.f32.gmra.mrb[0].mxu0 %v382
  %v533 = vpop.f32.mrb[0].mxu0
  %v534 = vadd.f32 %v426, %v533
  %v535 = vpop.f32.mrb[0].mxu0
  %536 = vmatprep.mubr.f32.mxu0 0.0
  %537 = vmatmul.mubr.f32.gmra.mrb[0].mxu0 %v383
  %v538 = vpop.f32.mrb[0].mxu0
  %v539 = vadd.f32 %v426, %v538
  %v540 = vpop.f32.mrb[0].mxu0
  %541 = vmatprep.mubr.f32.mxu0 0.0
  %542 = vmatmul.mubr.f32.gmra.mrb[0].mxu0 %v384
  %v543 = vpop.f32.mrb[0].mxu0
  %v544 = vadd.f32 %v426, %v543
  %v545 = vpop.f32.mrb[0].mxu0
  %546 = vmatprep.mubr.f32.mxu0 0.0
  %547 = vmatmul.mubr.f32.gmra.mrb[0].mxu0 %v385
  %v548 = vpop.f32.mrb[0].mxu0
  %v549 = vadd.f32 %v426, %v548
  %v550 = vpop.f32.mrb[0].mxu0
  %551 = vmatprep.mubr.f32.mxu0 0.0
  %552 = vmatmul.mubr.f32.gmra.mrb[0].mxu0 %v386
  %v553 = vpop.f32.mrb[0].mxu0
  %v554 = vadd.f32 %v426, %v553
  %v555 = vpop.f32.mrb[0].mxu0
  %556 = vmatprep.mubr.f32.mxu0 0.0
  %557 = vmatmul.mubr.f32.gmra.mrb[0].mxu0 %v387
  %v558 = vpop.f32.mrb[0].mxu0
  %v559 = vadd.f32 %v426, %v558
  %v560 = vpop.f32.mrb[0].mxu0
  %561 = vmatprep.mubr.f32.mxu0 0.0
  %562 = vmatmul.mubr.f32.gmra.mrb[0].mxu0 %v388
  %v563 = vpop.f32.mrb[0].mxu0
  %v564 = vadd.f32 %v426, %v563
  %v565 = vpop.f32.mrb[0].mxu0
  %566 = vmatprep.mubr.f32.mxu0 0.0
  %567 = vmatmul.mubr.f32.gmra.mrb[0].mxu0 %v389
  %v568 = vpop.f32.mrb[0].mxu0
  %v569 = vadd.f32 %v426, %v568
  %v570 = vpop.f32.mrb[0].mxu0
  %571 = vmatprep.mubr.f32.mxu0 0.0
  %572 = vmatmul.mubr.f32.gmra.mrb[0].mxu0 %v390
  %v573 = vpop.f32.mrb[0].mxu0
  %v574 = vadd.f32 %v426, %v573
  %v575 = vpop.f32.mrb[0].mxu0
  %576 = vmatprep.mubr.f32.mxu0 0.0
  %577 = vmatmul.mubr.f32.gmra.mrb[0].mxu0 %v391
  %v578 = vpop.f32.mrb[0].mxu0
  %v579 = vadd.f32 %v426, %v578
  %v580 = vpop.f32.mrb[0].mxu0
  %581 = vmatprep.mubr.f32.mxu0 0.0
  %582 = vmatmul.mubr.f32.gmra.mrb[0].mxu0 %v392
  %v583 = vpop.f32.mrb[0].mxu0
  %v584 = vadd.f32 %v426, %v583
  %v585 = vpop.f32.mrb[0].mxu0
  %586 = vmatprep.mubr.f32.mxu0 0.0
  %587 = vmatmul.mubr.f32.gmra.mrb[0].mxu0 %v393
  %v588 = vpop.f32.mrb[0].mxu0
  %v589 = vadd.f32 %v426, %v588
  %v590 = vpop.f32.mrb[0].mxu0
  %591 = vmatprep.mubr.f32.mxu0 0.0
  %592 = vmatmul.mubr.f32.gmra.mrb[0].mxu0 %v394
  %v593 = vpop.f32.mrb[0].mxu0
  %v594 = vadd.f32 %v426, %v593
  %v595 = vpop.f32.mrb[0].mxu0
  %596 = vmatprep.mubr.f32.mxu0 0.0
  %597 = vmatmul.mubr.f32.gmra.mrb[0].mxu0 %v395
  %v598 = vpop.f32.mrb[0].mxu0
  %v599 = vadd.f32 %v426, %v598
  %v600 = vpop.f32.mrb[0].mxu0
  %601 = vmatprep.mubr.f32.mxu0 0.0
  %602 = vmatmul.mubr.f32.gmra.mrb[0].mxu0 %v396
  %v603 = vpop.f32.mrb[0].mxu0
  %v604 = vadd.f32 %v426, %v603
  %v605 = vpop.f32.mrb[0].mxu0
  %606 = vmatprep.mubr.f32.mxu0 0.0
  %607 = vmatmul.mubr.f32.gmra.mrb[0].mxu0 %v397
  %v608 = vpop.f32.mrb[0].mxu0
  %v609 = vadd.f32 %v426, %v608
  %v610 = vpop.f32.mrb[0].mxu0
  %611 = vmatprep.mubr.f32.mxu0 0.0
  %612 = vmatmul.mubr.f32.gmra.mrb[0].mxu0 %v398
  %v613 = vpop.f32.mrb[0].mxu0
  %v614 = vadd.f32 %v426, %v613
  %v615 = vpop.f32.mrb[0].mxu0
  %616 = vmatprep.mubr.f32.mxu0 0.0
  %617 = vmatmul.mubr.f32.gmra.mrb[0].mxu0 %v399
  %v618 = vpop.f32.mrb[0].mxu0
  %v619 = vadd.f32 %v426, %v618
  %v620 = vpop.f32.mrb[0].mxu0
  %621 = vmatprep.mubr.f32.mxu0 0.0
  %622 = vmatmul.mubr.f32.gmra.mrb[0].mxu0 %v400
  %v623 = vpop.f32.mrb[0].mxu0
  %v624 = vadd.f32 %v426, %v623
  %v625 = vpop.f32.mrb[0].mxu0
  %626 = vmatprep.mubr.f32.mxu0 0.0
  %627 = vmatmul.mubr.f32.gmra.mrb[0].mxu0 %v401
  %v628 = vpop.f32.mrb[0].mxu0
  %v629 = vadd.f32 %v426, %v628
  %v630 = vpop.f32.mrb[0].mxu0
  %631 = vmatprep.mubr.f32.mxu0 0.0
  %632 = vmatmul.mubr.f32.gmra.mrb[0].mxu0 %v402
  %v633 = vpop.f32.mrb[0].mxu0
  %v634 = vadd.f32 %v426, %v633
  %v635 = vpop.f32.mrb[0].mxu0
  %636 = vmatprep.mubr.f32.mxu0 0.0
  %637 = vmatmul.mubr.f32.gmra.mrb[0].mxu0 %v403
  %v638 = vpop.f32.mrb[0].mxu0
  %v639 = vadd.f32 %v426, %v638
  %v640 = vpop.f32.mrb[0].mxu0
  %641 = vmatprep.mubr.f32.mxu0 0.0
  %642 = vmatmul.mubr.f32.gmra.mrb[0].mxu0 %v404
  %v643 = vpop.f32.mrb[0].mxu0
  %v644 = vadd.f32 %v426, %v643
  %v645 = vpop.f32.mrb[0].mxu0
  %646 = vmatprep.mubr.f32.mxu0 0.0
  %647 = vmatmul.mubr.f32.gmra.mrb[0].mxu0 %v405
  %v648 = vpop.f32.mrb[0].mxu0
  %v649 = vadd.f32 %v426, %v648
  %v650 = vpop.f32.mrb[0].mxu0
  %651 = vdwg.mxu0
  %v652 = vmax.f32 %v494, 0.0
  %v653 = vmax.f32 %v499, 0.0
  %v654 = vmax.f32 %v504, 0.0
  %v655 = vmax.f32 %v509, 0.0
  %v656 = vmax.f32 %v514, 0.0
  %v657 = vmax.f32 %v519, 0.0
  %v658 = vmax.f32 %v524, 0.0
  %v659 = vmax.f32 %v529, 0.0
  %v660 = vmax.f32 %v534, 0.0
  %v661 = vmax.f32 %v539, 0.0
  %v662 = vmax.f32 %v544, 0.0
  %v663 = vmax.f32 %v549, 0.0
  %v664 = vmax.f32 %v554, 0.0
  %v665 = vmax.f32 %v559, 0.0
  %v666 = vmax.f32 %v564, 0.0
  %v667 = vmax.f32 %v569, 0.0
  %v668 = vmax.f32 %v574, 0.0
  %v669 = vmax.f32 %v579, 0.0
  %v670 = vmax.f32 %v584, 0.0
  %v671 = vmax.f32 %v589, 0.0
  %v672 = vmax.f32 %v594, 0.0
  %v673 = vmax.f32 %v599, 0.0
  %v674 = vmax.f32 %v604, 0.0
  %v675 = vmax.f32 %v609, 0.0
  %v676 = vmax.f32 %v614, 0.0
  %v677 = vmax.f32 %v619, 0.0
  %v678 = vmax.f32 %v624, 0.0
  %v679 = vmax.f32 %v629, 0.0
  %v680 = vmax.f32 %v634, 0.0
  %v681 = vmax.f32 %v639, 0.0
  %v682 = vmax.f32 %v644, 0.0
  %v683 = vmax.f32 %v649, 0.0
  %v684 = vld [vmem:[%s1 + $0x88] sm:$0xff]
  %v685 = vld [vmem:[%s1 + $0x90] sm:$0xff]
  %v686 = vld [vmem:[%s1 + $0x98] sm:$0xff]
  %v687 = vld [vmem:[%s1 + $0xa0] sm:$0xff]
  %v688 = vld [vmem:[%s1 + $0xa8] sm:$0xff]
  %v689 = vld [vmem:[%s1 + $0xb0] sm:$0xff]
  %v690 = vld [vmem:[%s1 + $0xb8] sm:$0xff]
  %v691 = vld [vmem:[%s1 + $0xc0] sm:$0xff]
  %v692 = vld [vmem:[%s1 + $0xc8] sm:$0xff]
  %v693 = vld [vmem:[%s1 + $0xd0] sm:$0xff]
  %v694 = vld [vmem:[%s1 + $0xd8] sm:$0xff]
  %v695 = vld [vmem:[%s1 + $0xe0] sm:$0xff]
  %v696 = vld [vmem:[%s1 + $0xe8] sm:$0xff]
  %v697 = vld [vmem:[%s1 + $0xf0] sm:$0xff]
  %v698 = vld [vmem:[%s1 + $0xf8] sm:$0xff]
  %v699 = vld [vmem:[%s1 + $0x100] sm:$0xff]
  %v700 = vld [vmem:[%s2 + $0x2] sm:$0x1]
  %v701 = vlaneseq
  %v702 = vshrl.u32 %v701, 7
  %v703 = vsub.s32 0, %v702
  %v704 = vrot.slane %v700, %v703
  %705 = vmatprep.subr.mxu0 0.0
  %706 = vmatpush1.msra.mxu0 %v684
  %707 = vmatprep.subr.mxu0 0.0
  %708 = vmatpush1.msra.mxu0 %v685
  %709 = vmatprep.subr.mxu0 0.0
  %710 = vmatpush1.msra.mxu0 %v686
  %711 = vmatprep.subr.mxu0 0.0
  %712 = vmatpush1.msra.mxu0 %v687
  %713 = vmatprep.subr.mxu0 0.0
  %714 = vmatpush1.msra.mxu0 %v688
  %715 = vmatprep.subr.mxu0 0.0
  %716 = vmatpush1.msra.mxu0 %v689
  %717 = vmatprep.subr.mxu0 0.0
  %718 = vmatpush1.msra.mxu0 %v690
  %719 = vmatprep.subr.mxu0 0.0
  %720 = vmatpush1.msra.mxu0 %v691
  %721 = vmatprep.subr.mxu0 0.0
  %722 = vmatpush1.msra.mxu0 %v692
  %723 = vmatprep.subr.mxu0 0.0
  %724 = vmatpush1.msra.mxu0 %v693
  %725 = vmatprep.subr.mxu0 0.0
  %726 = vmatpush1.msra.mxu0 %v694
  %727 = vmatprep.subr.mxu0 0.0
  %728 = vmatpush1.msra.mxu0 %v695
  %729 = vmatprep.subr.mxu0 0.0
  %730 = vmatpush1.msra.mxu0 %v696
  %731 = vmatprep.subr.mxu0 0.0
  %732 = vmatpush1.msra.mxu0 %v697
  %733 = vmatprep.subr.mxu0 0.0
  %734 = vmatpush1.msra.mxu0 %v698
  %735 = vmatprep.subr.mxu0 0.0
  %736 = vmatpush1.msra.mxu0 %v699
  %737 = vmatprep.subr.mxu0 0.0
  %738 = vmatpush1.msra.mxu0 0.0
  %739 = vmatprep.subr.mxu0 0.0
  %740 = vmatpush1.msra.mxu0 0.0
  %741 = vmatprep.subr.mxu0 0.0
  %742 = vmatpush1.msra.mxu0 0.0
  %743 = vmatprep.subr.mxu0 0.0
  %744 = vmatpush1.msra.mxu0 0.0
  %745 = vmatprep.subr.mxu0 0.0
  %746 = vmatpush1.msra.mxu0 0.0
  %747 = vmatprep.subr.mxu0 0.0
  %748 = vmatpush1.msra.mxu0 0.0
  %749 = vmatprep.subr.mxu0 0.0
  %750 = vmatpush1.msra.mxu0 0.0
  %751 = vmatprep.subr.mxu0 0.0
  %752 = vmatpush1.msra.mxu0 0.0
  %753 = vmatprep.subr.mxu0 0.0
  %754 = vmatpush1.msra.mxu0 0.0
  %755 = vmatprep.subr.mxu0 0.0
  %756 = vmatpush1.msra.mxu0 0.0
  %757 = vmatprep.subr.mxu0 0.0
  %758 = vmatpush1.msra.mxu0 0.0
  %759 = vmatprep.subr.mxu0 0.0
  %760 = vmatpush1.msra.mxu0 0.0
  %761 = vmatprep.subr.mxu0 0.0
  %762 = vmatpush1.msra.mxu0 0.0
  %763 = vmatprep.subr.mxu0 0.0
  %764 = vmatpush1.msra.mxu0 0.0
  %765 = vmatprep.subr.mxu0 0.0
  %766 = vmatpush1.msra.mxu0 0.0
  %767 = vmatprep.subr.mxu0 0.0
  %768 = vmatpush1.msra.mxu0 0.0
  %769 = vmatprep.mubr.f32.mxu0 0.0
  %770 = vmatmul.mubr.f32.gmra.mrb[0].mxu0 %v652
  %v771 = vpop.f32.mrb[0].mxu0
  %v772 = vadd.f32 %v704, %v771
  %v773 = vpop.f32.mrb[0].mxu0
  %774 = vmatprep.mubr.f32.mxu0 0.0
  %775 = vmatmul.mubr.f32.gmra.mrb[0].mxu0 %v653
  %v776 = vpop.f32.mrb[0].mxu0
  %v777 = vadd.f32 %v704, %v776
  %v778 = vpop.f32.mrb[0].mxu0
  %779 = vmatprep.mubr.f32.mxu0 0.0
  %780 = vmatmul.mubr.f32.gmra.mrb[0].mxu0 %v654
  %v781 = vpop.f32.mrb[0].mxu0
  %v782 = vadd.f32 %v704, %v781
  %v783 = vpop.f32.mrb[0].mxu0
  %784 = vmatprep.mubr.f32.mxu0 0.0
  %785 = vmatmul.mubr.f32.gmra.mrb[0].mxu0 %v655
  %v786 = vpop.f32.mrb[0].mxu0
  %v787 = vadd.f32 %v704, %v786
  %v788 = vpop.f32.mrb[0].mxu0
  %789 = vmatprep.mubr.f32.mxu0 0.0
  %790 = vmatmul.mubr.f32.gmra.mrb[0].mxu0 %v656
  %v791 = vpop.f32.mrb[0].mxu0
  %v792 = vadd.f32 %v704, %v791
  %v793 = vpop.f32.mrb[0].mxu0
  %794 = vmatprep.mubr.f32.mxu0 0.0
  %795 = vmatmul.mubr.f32.gmra.mrb[0].mxu0 %v657
  %v796 = vpop.f32.mrb[0].mxu0
  %v797 = vadd.f32 %v704, %v796
  %v798 = vpop.f32.mrb[0].mxu0
  %799 = vmatprep.mubr.f32.mxu0 0.0
  %800 = vmatmul.mubr.f32.gmra.mrb[0].mxu0 %v658
  %v801 = vpop.f32.mrb[0].mxu0
  %v802 = vadd.f32 %v704, %v801
  %v803 = vpop.f32.mrb[0].mxu0
  %804 = vmatprep.mubr.f32.mxu0 0.0
  %805 = vmatmul.mubr.f32.gmra.mrb[0].mxu0 %v659
  %v806 = vpop.f32.mrb[0].mxu0
  %v807 = vadd.f32 %v704, %v806
  %v808 = vpop.f32.mrb[0].mxu0
  %809 = vmatprep.mubr.f32.mxu0 0.0
  %810 = vmatmul.mubr.f32.gmra.mrb[0].mxu0 %v660
  %v811 = vpop.f32.mrb[0].mxu0
  %v812 = vadd.f32 %v704, %v811
  %v813 = vpop.f32.mrb[0].mxu0
  %814 = vmatprep.mubr.f32.mxu0 0.0
  %815 = vmatmul.mubr.f32.gmra.mrb[0].mxu0 %v661
  %v816 = vpop.f32.mrb[0].mxu0
  %v817 = vadd.f32 %v704, %v816
  %v818 = vpop.f32.mrb[0].mxu0
  %819 = vmatprep.mubr.f32.mxu0 0.0
  %820 = vmatmul.mubr.f32.gmra.mrb[0].mxu0 %v662
  %v821 = vpop.f32.mrb[0].mxu0
  %v822 = vadd.f32 %v704, %v821
  %v823 = vpop.f32.mrb[0].mxu0
  %824 = vmatprep.mubr.f32.mxu0 0.0
  %825 = vmatmul.mubr.f32.gmra.mrb[0].mxu0 %v663
  %v826 = vpop.f32.mrb[0].mxu0
  %v827 = vadd.f32 %v704, %v826
  %v828 = vpop.f32.mrb[0].mxu0
  %829 = vmatprep.mubr.f32.mxu0 0.0
  %830 = vmatmul.mubr.f32.gmra.mrb[0].mxu0 %v664
  %v831 = vpop.f32.mrb[0].mxu0
  %v832 = vadd.f32 %v704, %v831
  %v833 = vpop.f32.mrb[0].mxu0
  %834 = vmatprep.mubr.f32.mxu0 0.0
  %835 = vmatmul.mubr.f32.gmra.mrb[0].mxu0 %v665
  %v836 = vpop.f32.mrb[0].mxu0
  %v837 = vadd.f32 %v704, %v836
  %v838 = vpop.f32.mrb[0].mxu0
  %839 = vmatprep.mubr.f32.mxu0 0.0
  %840 = vmatmul.mubr.f32.gmra.mrb[0].mxu0 %v666
  %v841 = vpop.f32.mrb[0].mxu0
  %v842 = vadd.f32 %v704, %v841
  %v843 = vpop.f32.mrb[0].mxu0
  %844 = vmatprep.mubr.f32.mxu0 0.0
  %845 = vmatmul.mubr.f32.gmra.mrb[0].mxu0 %v667
  %v846 = vpop.f32.mrb[0].mxu0
  %v847 = vadd.f32 %v704, %v846
  %v848 = vpop.f32.mrb[0].mxu0
  %849 = vmatprep.mubr.f32.mxu0 0.0
  %850 = vmatmul.mubr.f32.gmra.mrb[0].mxu0 %v668
  %v851 = vpop.f32.mrb[0].mxu0
  %v852 = vadd.f32 %v704, %v851
  %v853 = vpop.f32.mrb[0].mxu0
  %854 = vmatprep.mubr.f32.mxu0 0.0
  %855 = vmatmul.mubr.f32.gmra.mrb[0].mxu0 %v669
  %v856 = vpop.f32.mrb[0].mxu0
  %v857 = vadd.f32 %v704, %v856
  %v858 = vpop.f32.mrb[0].mxu0
  %859 = vmatprep.mubr.f32.mxu0 0.0
  %860 = vmatmul.mubr.f32.gmra.mrb[0].mxu0 %v670
  %v861 = vpop.f32.mrb[0].mxu0
  %v862 = vadd.f32 %v704, %v861
  %v863 = vpop.f32.mrb[0].mxu0
  %864 = vmatprep.mubr.f32.mxu0 0.0
  %865 = vmatmul.mubr.f32.gmra.mrb[0].mxu0 %v671
  %v866 = vpop.f32.mrb[0].mxu0
  %v867 = vadd.f32 %v704, %v866
  %v868 = vpop.f32.mrb[0].mxu0
  %869 = vmatprep.mubr.f32.mxu0 0.0
  %870 = vmatmul.mubr.f32.gmra.mrb[0].mxu0 %v672
  %v871 = vpop.f32.mrb[0].mxu0
  %v872 = vadd.f32 %v704, %v871
  %v873 = vpop.f32.mrb[0].mxu0
  %874 = vmatprep.mubr.f32.mxu0 0.0
  %875 = vmatmul.mubr.f32.gmra.mrb[0].mxu0 %v673
  %v876 = vpop.f32.mrb[0].mxu0
  %v877 = vadd.f32 %v704, %v876
  %v878 = vpop.f32.mrb[0].mxu0
  %879 = vmatprep.mubr.f32.mxu0 0.0
  %880 = vmatmul.mubr.f32.gmra.mrb[0].mxu0 %v674
  %v881 = vpop.f32.mrb[0].mxu0
  %v882 = vadd.f32 %v704, %v881
  %v883 = vpop.f32.mrb[0].mxu0
  %884 = vmatprep.mubr.f32.mxu0 0.0
  %885 = vmatmul.mubr.f32.gmra.mrb[0].mxu0 %v675
  %v886 = vpop.f32.mrb[0].mxu0
  %v887 = vadd.f32 %v704, %v886
  %v888 = vpop.f32.mrb[0].mxu0
  %889 = vmatprep.mubr.f32.mxu0 0.0
  %890 = vmatmul.mubr.f32.gmra.mrb[0].mxu0 %v676
  %v891 = vpop.f32.mrb[0].mxu0
  %v892 = vadd.f32 %v704, %v891
  %v893 = vpop.f32.mrb[0].mxu0
  %894 = vmatprep.mubr.f32.mxu0 0.0
  %895 = vmatmul.mubr.f32.gmra.mrb[0].mxu0 %v677
  %v896 = vpop.f32.mrb[0].mxu0
  %v897 = vadd.f32 %v704, %v896
  %v898 = vpop.f32.mrb[0].mxu0
  %899 = vmatprep.mubr.f32.mxu0 0.0
  %900 = vmatmul.mubr.f32.gmra.mrb[0].mxu0 %v678
  %v901 = vpop.f32.mrb[0].mxu0
  %v902 = vadd.f32 %v704, %v901
  %v903 = vpop.f32.mrb[0].mxu0
  %904 = vmatprep.mubr.f32.mxu0 0.0
  %905 = vmatmul.mubr.f32.gmra.mrb[0].mxu0 %v679
  %v906 = vpop.f32.mrb[0].mxu0
  %v907 = vadd.f32 %v704, %v906
  %v908 = vpop.f32.mrb[0].mxu0
  %909 = vmatprep.mubr.f32.mxu0 0.0
  %910 = vmatmul.mubr.f32.gmra.mrb[0].mxu0 %v680
  %v911 = vpop.f32.mrb[0].mxu0
  %v912 = vadd.f32 %v704, %v911
  %v913 = vpop.f32.mrb[0].mxu0
  %914 = vmatprep.mubr.f32.mxu0 0.0
  %915 = vmatmul.mubr.f32.gmra.mrb[0].mxu0 %v681
  %v916 = vpop.f32.mrb[0].mxu0
  %v917 = vadd.f32 %v704, %v916
  %v918 = vpop.f32.mrb[0].mxu0
  %919 = vmatprep.mubr.f32.mxu0 0.0
  %920 = vmatmul.mubr.f32.gmra.mrb[0].mxu0 %v682
  %v921 = vpop.f32.mrb[0].mxu0
  %v922 = vadd.f32 %v704, %v921
  %v923 = vpop.f32.mrb[0].mxu0
  %924 = vmatprep.mubr.f32.mxu0 0.0
  %925 = vmatmul.mubr.f32.gmra.mrb[0].mxu0 %v683
  %v926 = vpop.f32.mrb[0].mxu0
  %v927 = vadd.f32 %v704, %v926
  %v928 = vpop.f32.mrb[0].mxu0
  %929 = vdwg.mxu0
  %v930 = vmax.f32 %v772, 0.0
  %v931 = vmax.f32 %v777, 0.0
  %v932 = vmax.f32 %v782, 0.0
  %v933 = vmax.f32 %v787, 0.0
  %v934 = vmax.f32 %v792, 0.0
  %v935 = vmax.f32 %v797, 0.0
  %v936 = vmax.f32 %v802, 0.0
  %v937 = vmax.f32 %v807, 0.0
  %v938 = vmax.f32 %v812, 0.0
  %v939 = vmax.f32 %v817, 0.0
  %v940 = vmax.f32 %v822, 0.0
  %v941 = vmax.f32 %v827, 0.0
  %v942 = vmax.f32 %v832, 0.0
  %v943 = vmax.f32 %v837, 0.0
  %v944 = vmax.f32 %v842, 0.0
  %v945 = vmax.f32 %v847, 0.0
  %v946 = vmax.f32 %v852, 0.0
  %v947 = vmax.f32 %v857, 0.0
  %v948 = vmax.f32 %v862, 0.0
  %v949 = vmax.f32 %v867, 0.0
  %v950 = vmax.f32 %v872, 0.0
  %v951 = vmax.f32 %v877, 0.0
  %v952 = vmax.f32 %v882, 0.0
  %v953 = vmax.f32 %v887, 0.0
  %v954 = vmax.f32 %v892, 0.0
  %v955 = vmax.f32 %v897, 0.0
  %v956 = vmax.f32 %v902, 0.0
  %v957 = vmax.f32 %v907, 0.0
  %v958 = vmax.f32 %v912, 0.0
  %v959 = vmax.f32 %v917, 0.0
  %v960 = vmax.f32 %v922, 0.0
  %v961 = vmax.f32 %v927, 0.0
  %v962 = vld [vmem:[%s1 + $0x108] sm:$0xff]
  %v963 = vld [vmem:[%s1 + $0x110] sm:$0xff]
  %v964 = vld [vmem:[%s1 + $0x118] sm:$0xff]
  %v965 = vld [vmem:[%s1 + $0x120] sm:$0xff]
  %v966 = vld [vmem:[%s1 + $0x128] sm:$0xff]
  %v967 = vld [vmem:[%s1 + $0x130] sm:$0xff]
  %v968 = vld [vmem:[%s1 + $0x138] sm:$0xff]
  %v969 = vld [vmem:[%s1 + $0x140] sm:$0xff]
  %v970 = vld [vmem:[%s1 + $0x148] sm:$0xff]
  %v971 = vld [vmem:[%s1 + $0x150] sm:$0xff]
  %v972 = vld [vmem:[%s1 + $0x158] sm:$0xff]
  %v973 = vld [vmem:[%s1 + $0x160] sm:$0xff]
  %v974 = vld [vmem:[%s1 + $0x168] sm:$0xff]
  %v975 = vld [vmem:[%s1 + $0x170] sm:$0xff]
  %v976 = vld [vmem:[%s1 + $0x178] sm:$0xff]
  %v977 = vld [vmem:[%s1 + $0x180] sm:$0xff]
  %v978 = vld [vmem:[%s2 + $0x3] sm:$0x1]
  %v979 = vlaneseq
  %v980 = vshrl.u32 %v979, 7
  %v981 = vsub.s32 0, %v980
  %v982 = vrot.slane %v978, %v981
  %983 = vmatprep.subr.mxu0 0.0
  %984 = vmatpush1.msra.mxu0 %v962
  %985 = vmatprep.subr.mxu0 0.0
  %986 = vmatpush1.msra.mxu0 %v963
  %987 = vmatprep.subr.mxu0 0.0
  %988 = vmatpush1.msra.mxu0 %v964
  %989 = vmatprep.subr.mxu0 0.0
  %990 = vmatpush1.msra.mxu0 %v965
  %991 = vmatprep.subr.mxu0 0.0
  %992 = vmatpush1.msra.mxu0 %v966
  %993 = vmatprep.subr.mxu0 0.0
  %994 = vmatpush1.msra.mxu0 %v967
  %995 = vmatprep.subr.mxu0 0.0
  %996 = vmatpush1.msra.mxu0 %v968
  %997 = vmatprep.subr.mxu0 0.0
  %998 = vmatpush1.msra.mxu0 %v969
  %999 = vmatprep.subr.mxu0 0.0
  %1000 = vmatpush1.msra.mxu0 %v970
  %1001 = vmatprep.subr.mxu0 0.0
  %1002 = vmatpush1.msra.mxu0 %v971
  %1003 = vmatprep.subr.mxu0 0.0
  %1004 = vmatpush1.msra.mxu0 %v972
  %1005 = vmatprep.subr.mxu0 0.0
  %1006 = vmatpush1.msra.mxu0 %v973
  %1007 = vmatprep.subr.mxu0 0.0
  %1008 = vmatpush1.msra.mxu0 %v974
  %1009 = vmatprep.subr.mxu0 0.0
  %1010 = vmatpush1.msra.mxu0 %v975
  %1011 = vmatprep.subr.mxu0 0.0
  %1012 = vmatpush1.msra.mxu0 %v976
  %1013 = vmatprep.subr.mxu0 0.0
  %1014 = vmatpush1.msra.mxu0 %v977
  %1015 = vmatprep.subr.mxu0 0.0
  %1016 = vmatpush1.msra.mxu0 0.0
  %1017 = vmatprep.subr.mxu0 0.0
  %1018 = vmatpush1.msra.mxu0 0.0
  %1019 = vmatprep.subr.mxu0 0.0
  %1020 = vmatpush1.msra.mxu0 0.0
  %1021 = vmatprep.subr.mxu0 0.0
  %1022 = vmatpush1.msra.mxu0 0.0
  %1023 = vmatprep.subr.mxu0 0.0
  %1024 = vmatpush1.msra.mxu0 0.0
  %1025 = vmatprep.subr.mxu0 0.0
  %1026 = vmatpush1.msra.mxu0 0.0
  %1027 = vmatprep.subr.mxu0 0.0
  %1028 = vmatpush1.msra.mxu0 0.0
  %1029 = vmatprep.subr.mxu0 0.0
  %1030 = vmatpush1.msra.mxu0 0.0
  %1031 = vmatprep.subr.mxu0 0.0
  %1032 = vmatpush1.msra.mxu0 0.0
  %1033 = vmatprep.subr.mxu0 0.0
  %1034 = vmatpush1.msra.mxu0 0.0
  %1035 = vmatprep.subr.mxu0 0.0
  %1036 = vmatpush1.msra.mxu0 0.0
  %1037 = vmatprep.subr.mxu0 0.0
  %1038 = vmatpush1.msra.mxu0 0.0
  %1039 = vmatprep.subr.mxu0 0.0
  %1040 = vmatpush1.msra.mxu0 0.0
  %1041 = vmatprep.subr.mxu0 0.0
  %1042 = vmatpush1.msra.mxu0 0.0
  %1043 = vmatprep.subr.mxu0 0.0
  %1044 = vmatpush1.msra.mxu0 0.0
  %1045 = vmatprep.subr.mxu0 0.0
  %1046 = vmatpush1.msra.mxu0 0.0
  %1047 = vmatprep.mubr.f32.mxu0 0.0
  %1048 = vmatmul.mubr.f32.gmra.mrb[0].mxu0 %v930
  %v1049 = vpop.f32.mrb[0].mxu0
  %v1050 = vadd.f32 %v982, %v1049
  %v1051 = vpop.f32.mrb[0].mxu0
  %1052 = vmatprep.mubr.f32.mxu0 0.0
  %1053 = vmatmul.mubr.f32.gmra.mrb[0].mxu0 %v931
  %v1054 = vpop.f32.mrb[0].mxu0
  %v1055 = vadd.f32 %v982, %v1054
  %v1056 = vpop.f32.mrb[0].mxu0
  %1057 = vmatprep.mubr.f32.mxu0 0.0
  %1058 = vmatmul.mubr.f32.gmra.mrb[0].mxu0 %v932
  %v1059 = vpop.f32.mrb[0].mxu0
  %v1060 = vadd.f32 %v982, %v1059
  %v1061 = vpop.f32.mrb[0].mxu0
  %1062 = vmatprep.mubr.f32.mxu0 0.0
  %1063 = vmatmul.mubr.f32.gmra.mrb[0].mxu0 %v933
  %v1064 = vpop.f32.mrb[0].mxu0
  %v1065 = vadd.f32 %v982, %v1064
  %v1066 = vpop.f32.mrb[0].mxu0
  %1067 = vmatprep.mubr.f32.mxu0 0.0
  %1068 = vmatmul.mubr.f32.gmra.mrb[0].mxu0 %v934
  %v1069 = vpop.f32.mrb[0].mxu0
  %v1070 = vadd.f32 %v982, %v1069
  %v1071 = vpop.f32.mrb[0].mxu0
  %1072 = vmatprep.mubr.f32.mxu0 0.0
  %1073 = vmatmul.mubr.f32.gmra.mrb[0].mxu0 %v935
  %v1074 = vpop.f32.mrb[0].mxu0
  %v1075 = vadd.f32 %v982, %v1074
  %v1076 = vpop.f32.mrb[0].mxu0
  %1077 = vmatprep.mubr.f32.mxu0 0.0
  %1078 = vmatmul.mubr.f32.gmra.mrb[0].mxu0 %v936
  %v1079 = vpop.f32.mrb[0].mxu0
  %v1080 = vadd.f32 %v982, %v1079
  %v1081 = vpop.f32.mrb[0].mxu0
  %1082 = vmatprep.mubr.f32.mxu0 0.0
  %1083 = vmatmul.mubr.f32.gmra.mrb[0].mxu0 %v937
  %v1084 = vpop.f32.mrb[0].mxu0
  %v1085 = vadd.f32 %v982, %v1084
  %v1086 = vpop.f32.mrb[0].mxu0
  %1087 = vmatprep.mubr.f32.mxu0 0.0
  %1088 = vmatmul.mubr.f32.gmra.mrb[0].mxu0 %v938
  %v1089 = vpop.f32.mrb[0].mxu0
  %v1090 = vadd.f32 %v982, %v1089
  %v1091 = vpop.f32.mrb[0].mxu0
  %1092 = vmatprep.mubr.f32.mxu0 0.0
  %1093 = vmatmul.mubr.f32.gmra.mrb[0].mxu0 %v939
  %v1094 = vpop.f32.mrb[0].mxu0
  %v1095 = vadd.f32 %v982, %v1094
  %v1096 = vpop.f32.mrb[0].mxu0
  %1097 = vmatprep.mubr.f32.mxu0 0.0
  %1098 = vmatmul.mubr.f32.gmra.mrb[0].mxu0 %v940
  %v1099 = vpop.f32.mrb[0].mxu0
  %v1100 = vadd.f32 %v982, %v1099
  %v1101 = vpop.f32.mrb[0].mxu0
  %1102 = vmatprep.mubr.f32.mxu0 0.0
  %1103 = vmatmul.mubr.f32.gmra.mrb[0].mxu0 %v941
  %v1104 = vpop.f32.mrb[0].mxu0
  %v1105 = vadd.f32 %v982, %v1104
  %v1106 = vpop.f32.mrb[0].mxu0
  %1107 = vmatprep.mubr.f32.mxu0 0.0
  %1108 = vmatmul.mubr.f32.gmra.mrb[0].mxu0 %v942
  %v1109 = vpop.f32.mrb[0].mxu0
  %v1110 = vadd.f32 %v982, %v1109
  %v1111 = vpop.f32.mrb[0].mxu0
  %1112 = vmatprep.mubr.f32.mxu0 0.0
  %1113 = vmatmul.mubr.f32.gmra.mrb[0].mxu0 %v943
  %v1114 = vpop.f32.mrb[0].mxu0
  %v1115 = vadd.f32 %v982, %v1114
  %v1116 = vpop.f32.mrb[0].mxu0
  %1117 = vmatprep.mubr.f32.mxu0 0.0
  %1118 = vmatmul.mubr.f32.gmra.mrb[0].mxu0 %v944
  %v1119 = vpop.f32.mrb[0].mxu0
  %v1120 = vadd.f32 %v982, %v1119
  %v1121 = vpop.f32.mrb[0].mxu0
  %1122 = vmatprep.mubr.f32.mxu0 0.0
  %1123 = vmatmul.mubr.f32.gmra.mrb[0].mxu0 %v945
  %v1124 = vpop.f32.mrb[0].mxu0
  %v1125 = vadd.f32 %v982, %v1124
  %v1126 = vpop.f32.mrb[0].mxu0
  %1127 = vmatprep.mubr.f32.mxu0 0.0
  %1128 = vmatmul.mubr.f32.gmra.mrb[0].mxu0 %v946
  %v1129 = vpop.f32.mrb[0].mxu0
  %v1130 = vadd.f32 %v982, %v1129
  %v1131 = vpop.f32.mrb[0].mxu0
  %1132 = vmatprep.mubr.f32.mxu0 0.0
  %1133 = vmatmul.mubr.f32.gmra.mrb[0].mxu0 %v947
  %v1134 = vpop.f32.mrb[0].mxu0
  %v1135 = vadd.f32 %v982, %v1134
  %v1136 = vpop.f32.mrb[0].mxu0
  %1137 = vmatprep.mubr.f32.mxu0 0.0
  %1138 = vmatmul.mubr.f32.gmra.mrb[0].mxu0 %v948
  %v1139 = vpop.f32.mrb[0].mxu0
  %v1140 = vadd.f32 %v982, %v1139
  %v1141 = vpop.f32.mrb[0].mxu0
  %1142 = vmatprep.mubr.f32.mxu0 0.0
  %1143 = vmatmul.mubr.f32.gmra.mrb[0].mxu0 %v949
  %v1144 = vpop.f32.mrb[0].mxu0
  %v1145 = vadd.f32 %v982, %v1144
  %v1146 = vpop.f32.mrb[0].mxu0
  %1147 = vmatprep.mubr.f32.mxu0 0.0
  %1148 = vmatmul.mubr.f32.gmra.mrb[0].mxu0 %v950
  %v1149 = vpop.f32.mrb[0].mxu0
  %v1150 = vadd.f32 %v982, %v1149
  %v1151 = vpop.f32.mrb[0].mxu0
  %1152 = vmatprep.mubr.f32.mxu0 0.0
  %1153 = vmatmul.mubr.f32.gmra.mrb[0].mxu0 %v951
  %v1154 = vpop.f32.mrb[0].mxu0
  %v1155 = vadd.f32 %v982, %v1154
  %v1156 = vpop.f32.mrb[0].mxu0
  %1157 = vmatprep.mubr.f32.mxu0 0.0
  %1158 = vmatmul.mubr.f32.gmra.mrb[0].mxu0 %v952
  %v1159 = vpop.f32.mrb[0].mxu0
  %v1160 = vadd.f32 %v982, %v1159
  %v1161 = vpop.f32.mrb[0].mxu0
  %1162 = vmatprep.mubr.f32.mxu0 0.0
  %1163 = vmatmul.mubr.f32.gmra.mrb[0].mxu0 %v953
  %v1164 = vpop.f32.mrb[0].mxu0
  %v1165 = vadd.f32 %v982, %v1164
  %v1166 = vpop.f32.mrb[0].mxu0
  %1167 = vmatprep.mubr.f32.mxu0 0.0
  %1168 = vmatmul.mubr.f32.gmra.mrb[0].mxu0 %v954
  %v1169 = vpop.f32.mrb[0].mxu0
  %v1170 = vadd.f32 %v982, %v1169
  %v1171 = vpop.f32.mrb[0].mxu0
  %1172 = vmatprep.mubr.f32.mxu0 0.0
  %1173 = vmatmul.mubr.f32.gmra.mrb[0].mxu0 %v955
  %v1174 = vpop.f32.mrb[0].mxu0
  %v1175 = vadd.f32 %v982, %v1174
  %v1176 = vpop.f32.mrb[0].mxu0
  %1177 = vmatprep.mubr.f32.mxu0 0.0
  %1178 = vmatmul.mubr.f32.gmra.mrb[0].mxu0 %v956
  %v1179 = vpop.f32.mrb[0].mxu0
  %v1180 = vadd.f32 %v982, %v1179
  %v1181 = vpop.f32.mrb[0].mxu0
  %1182 = vmatprep.mubr.f32.mxu0 0.0
  %1183 = vmatmul.mubr.f32.gmra.mrb[0].mxu0 %v957
  %v1184 = vpop.f32.mrb[0].mxu0
  %v1185 = vadd.f32 %v982, %v1184
  %v1186 = vpop.f32.mrb[0].mxu0
  %1187 = vmatprep.mubr.f32.mxu0 0.0
  %1188 = vmatmul.mubr.f32.gmra.mrb[0].mxu0 %v958
  %v1189 = vpop.f32.mrb[0].mxu0
  %v1190 = vadd.f32 %v982, %v1189
  %v1191 = vpop.f32.mrb[0].mxu0
  %1192 = vmatprep.mubr.f32.mxu0 0.0
  %1193 = vmatmul.mubr.f32.gmra.mrb[0].mxu0 %v959
  %v1194 = vpop.f32.mrb[0].mxu0
  %v1195 = vadd.f32 %v982, %v1194
  %v1196 = vpop.f32.mrb[0].mxu0
  %1197 = vmatprep.mubr.f32.mxu0 0.0
  %1198 = vmatmul.mubr.f32.gmra.mrb[0].mxu0 %v960
  %v1199 = vpop.f32.mrb[0].mxu0
  %v1200 = vadd.f32 %v982, %v1199
  %v1201 = vpop.f32.mrb[0].mxu0
  %1202 = vmatprep.mubr.f32.mxu0 0.0
  %1203 = vmatmul.mubr.f32.gmra.mrb[0].mxu0 %v961
  %v1204 = vpop.f32.mrb[0].mxu0
  %v1205 = vadd.f32 %v982, %v1204
  %v1206 = vpop.f32.mrb[0].mxu0
  %1207 = vdwg.mxu0
  %v1208 = vmax.f32 %v1050, 0.0
  %v1209 = vmax.f32 %v1055, 0.0
  %v1210 = vmax.f32 %v1060, 0.0
  %v1211 = vmax.f32 %v1065, 0.0
  %v1212 = vmax.f32 %v1070, 0.0
  %v1213 = vmax.f32 %v1075, 0.0
  %v1214 = vmax.f32 %v1080, 0.0
  %v1215 = vmax.f32 %v1085, 0.0
  %v1216 = vmax.f32 %v1090, 0.0
  %v1217 = vmax.f32 %v1095, 0.0
  %v1218 = vmax.f32 %v1100, 0.0
  %v1219 = vmax.f32 %v1105, 0.0
  %v1220 = vmax.f32 %v1110, 0.0
  %v1221 = vmax.f32 %v1115, 0.0
  %v1222 = vmax.f32 %v1120, 0.0
  %v1223 = vmax.f32 %v1125, 0.0
  %v1224 = vmax.f32 %v1130, 0.0
  %v1225 = vmax.f32 %v1135, 0.0
  %v1226 = vmax.f32 %v1140, 0.0
  %v1227 = vmax.f32 %v1145, 0.0
  %v1228 = vmax.f32 %v1150, 0.0
  %v1229 = vmax.f32 %v1155, 0.0
  %v1230 = vmax.f32 %v1160, 0.0
  %v1231 = vmax.f32 %v1165, 0.0
  %v1232 = vmax.f32 %v1170, 0.0
  %v1233 = vmax.f32 %v1175, 0.0
  %v1234 = vmax.f32 %v1180, 0.0
  %v1235 = vmax.f32 %v1185, 0.0
  %v1236 = vmax.f32 %v1190, 0.0
  %v1237 = vmax.f32 %v1195, 0.0
  %v1238 = vmax.f32 %v1200, 0.0
  %v1239 = vmax.f32 %v1205, 0.0
  %v1240 = vld [vmem:[%s1 + $0x188] sm:$0xff]
  %v1241 = vld [vmem:[%s1 + $0x190] sm:$0xff]
  %v1242 = vld [vmem:[%s1 + $0x198] sm:$0xff]
  %v1243 = vld [vmem:[%s1 + $0x1a0] sm:$0xff]
  %v1244 = vld [vmem:[%s1 + $0x1a8] sm:$0xff]
  %v1245 = vld [vmem:[%s1 + $0x1b0] sm:$0xff]
  %v1246 = vld [vmem:[%s1 + $0x1b8] sm:$0xff]
  %v1247 = vld [vmem:[%s1 + $0x1c0] sm:$0xff]
  %v1248 = vld [vmem:[%s1 + $0x1c8] sm:$0xff]
  %v1249 = vld [vmem:[%s1 + $0x1d0] sm:$0xff]
  %v1250 = vld [vmem:[%s1 + $0x1d8] sm:$0xff]
  %v1251 = vld [vmem:[%s1 + $0x1e0] sm:$0xff]
  %v1252 = vld [vmem:[%s1 + $0x1e8] sm:$0xff]
  %v1253 = vld [vmem:[%s1 + $0x1f0] sm:$0xff]
  %v1254 = vld [vmem:[%s1 + $0x1f8] sm:$0xff]
  %v1255 = vld [vmem:[%s1 + $0x200] sm:$0xff]
  %v1256 = vld [vmem:[%s2 + $0x4] sm:$0x1]
  %v1257 = vlaneseq
  %v1258 = vshrl.u32 %v1257, 7
  %v1259 = vsub.s32 0, %v1258
  %v1260 = vrot.slane %v1256, %v1259
  %1261 = vmatprep.subr.mxu0 0.0
  %1262 = vmatpush1.msra.mxu0 %v1240
  %1263 = vmatprep.subr.mxu0 0.0
  %1264 = vmatpush1.msra.mxu0 %v1241
  %1265 = vmatprep.subr.mxu0 0.0
  %1266 = vmatpush1.msra.mxu0 %v1242
  %1267 = vmatprep.subr.mxu0 0.0
  %1268 = vmatpush1.msra.mxu0 %v1243
  %1269 = vmatprep.subr.mxu0 0.0
  %1270 = vmatpush1.msra.mxu0 %v1244
  %1271 = vmatprep.subr.mxu0 0.0
  %1272 = vmatpush1.msra.mxu0 %v1245
  %1273 = vmatprep.subr.mxu0 0.0
  %1274 = vmatpush1.msra.mxu0 %v1246
  %1275 = vmatprep.subr.mxu0 0.0
  %1276 = vmatpush1.msra.mxu0 %v1247
  %1277 = vmatprep.subr.mxu0 0.0
  %1278 = vmatpush1.msra.mxu0 %v1248
  %1279 = vmatprep.subr.mxu0 0.0
  %1280 = vmatpush1.msra.mxu0 %v1249
  %1281 = vmatprep.subr.mxu0 0.0
  %1282 = vmatpush1.msra.mxu0 %v1250
  %1283 = vmatprep.subr.mxu0 0.0
  %1284 = vmatpush1.msra.mxu0 %v1251
  %1285 = vmatprep.subr.mxu0 0.0
  %1286 = vmatpush1.msra.mxu0 %v1252
  %1287 = vmatprep.subr.mxu0 0.0
  %1288 = vmatpush1.msra.mxu0 %v1253
  %1289 = vmatprep.subr.mxu0 0.0
  %1290 = vmatpush1.msra.mxu0 %v1254
  %1291 = vmatprep.subr.mxu0 0.0
  %1292 = vmatpush1.msra.mxu0 %v1255
  %1293 = vmatprep.subr.mxu0 0.0
  %1294 = vmatpush1.msra.mxu0 0.0
  %1295 = vmatprep.subr.mxu0 0.0
  %1296 = vmatpush1.msra.mxu0 0.0
  %1297 = vmatprep.subr.mxu0 0.0
  %1298 = vmatpush1.msra.mxu0 0.0
  %1299 = vmatprep.subr.mxu0 0.0
  %1300 = vmatpush1.msra.mxu0 0.0
  %1301 = vmatprep.subr.mxu0 0.0
  %1302 = vmatpush1.msra.mxu0 0.0
  %1303 = vmatprep.subr.mxu0 0.0
  %1304 = vmatpush1.msra.mxu0 0.0
  %1305 = vmatprep.subr.mxu0 0.0
  %1306 = vmatpush1.msra.mxu0 0.0
  %1307 = vmatprep.subr.mxu0 0.0
  %1308 = vmatpush1.msra.mxu0 0.0
  %1309 = vmatprep.subr.mxu0 0.0
  %1310 = vmatpush1.msra.mxu0 0.0
  %1311 = vmatprep.subr.mxu0 0.0
  %1312 = vmatpush1.msra.mxu0 0.0
  %1313 = vmatprep.subr.mxu0 0.0
  %1314 = vmatpush1.msra.mxu0 0.0
  %1315 = vmatprep.subr.mxu0 0.0
  %1316 = vmatpush1.msra.mxu0 0.0
  %1317 = vmatprep.subr.mxu0 0.0
  %1318 = vmatpush1.msra.mxu0 0.0
  %1319 = vmatprep.subr.mxu0 0.0
  %1320 = vmatpush1.msra.mxu0 0.0
  %1321 = vmatprep.subr.mxu0 0.0
  %1322 = vmatpush1.msra.mxu0 0.0
  %1323 = vmatprep.subr.mxu0 0.0
  %1324 = vmatpush1.msra.mxu0 0.0
  %1325 = vmatprep.mubr.f32.mxu0 0.0
  %1326 = vmatmul.mubr.f32.gmra.mrb[0].mxu0 %v1208
  %v1327 = vpop.f32.mrb[0].mxu0
  %v1328 = vadd.f32 %v1260, %v1327
  %v1329 = vpop.f32.mrb[0].mxu0
  %1330 = vmatprep.mubr.f32.mxu0 0.0
  %1331 = vmatmul.mubr.f32.gmra.mrb[0].mxu0 %v1209
  %v1332 = vpop.f32.mrb[0].mxu0
  %v1333 = vadd.f32 %v1260, %v1332
  %v1334 = vpop.f32.mrb[0].mxu0
  %1335 = vmatprep.mubr.f32.mxu0 0.0
  %1336 = vmatmul.mubr.f32.gmra.mrb[0].mxu0 %v1210
  %v1337 = vpop.f32.mrb[0].mxu0
  %v1338 = vadd.f32 %v1260, %v1337
  %v1339 = vpop.f32.mrb[0].mxu0
  %1340 = vmatprep.mubr.f32.mxu0 0.0
  %1341 = vmatmul.mubr.f32.gmra.mrb[0].mxu0 %v1211
  %v1342 = vpop.f32.mrb[0].mxu0
  %v1343 = vadd.f32 %v1260, %v1342
  %v1344 = vpop.f32.mrb[0].mxu0
  %1345 = vmatprep.mubr.f32.mxu0 0.0
  %1346 = vmatmul.mubr.f32.gmra.mrb[0].mxu0 %v1212
  %v1347 = vpop.f32.mrb[0].mxu0
  %v1348 = vadd.f32 %v1260, %v1347
  %v1349 = vpop.f32.mrb[0].mxu0
  %1350 = vmatprep.mubr.f32.mxu0 0.0
  %1351 = vmatmul.mubr.f32.gmra.mrb[0].mxu0 %v1213
  %v1352 = vpop.f32.mrb[0].mxu0
  %v1353 = vadd.f32 %v1260, %v1352
  %v1354 = vpop.f32.mrb[0].mxu0
  %1355 = vmatprep.mubr.f32.mxu0 0.0
  %1356 = vmatmul.mubr.f32.gmra.mrb[0].mxu0 %v1214
  %v1357 = vpop.f32.mrb[0].mxu0
  %v1358 = vadd.f32 %v1260, %v1357
  %v1359 = vpop.f32.mrb[0].mxu0
  %1360 = vmatprep.mubr.f32.mxu0 0.0
  %1361 = vmatmul.mubr.f32.gmra.mrb[0].mxu0 %v1215
  %v1362 = vpop.f32.mrb[0].mxu0
  %v1363 = vadd.f32 %v1260, %v1362
  %v1364 = vpop.f32.mrb[0].mxu0
  %1365 = vmatprep.mubr.f32.mxu0 0.0
  %1366 = vmatmul.mubr.f32.gmra.mrb[0].mxu0 %v1216
  %v1367 = vpop.f32.mrb[0].mxu0
  %v1368 = vadd.f32 %v1260, %v1367
  %v1369 = vpop.f32.mrb[0].mxu0
  %1370 = vmatprep.mubr.f32.mxu0 0.0
  %1371 = vmatmul.mubr.f32.gmra.mrb[0].mxu0 %v1217
  %v1372 = vpop.f32.mrb[0].mxu0
  %v1373 = vadd.f32 %v1260, %v1372
  %v1374 = vpop.f32.mrb[0].mxu0
  %1375 = vmatprep.mubr.f32.mxu0 0.0
  %1376 = vmatmul.mubr.f32.gmra.mrb[0].mxu0 %v1218
  %v1377 = vpop.f32.mrb[0].mxu0
  %v1378 = vadd.f32 %v1260, %v1377
  %v1379 = vpop.f32.mrb[0].mxu0
  %1380 = vmatprep.mubr.f32.mxu0 0.0
  %1381 = vmatmul.mubr.f32.gmra.mrb[0].mxu0 %v1219
  %v1382 = vpop.f32.mrb[0].mxu0
  %v1383 = vadd.f32 %v1260, %v1382
  %v1384 = vpop.f32.mrb[0].mxu0
  %1385 = vmatprep.mubr.f32.mxu0 0.0
  %1386 = vmatmul.mubr.f32.gmra.mrb[0].mxu0 %v1220
  %v1387 = vpop.f32.mrb[0].mxu0
  %v1388 = vadd.f32 %v1260, %v1387
  %v1389 = vpop.f32.mrb[0].mxu0
  %1390 = vmatprep.mubr.f32.mxu0 0.0
  %1391 = vmatmul.mubr.f32.gmra.mrb[0].mxu0 %v1221
  %v1392 = vpop.f32.mrb[0].mxu0
  %v1393 = vadd.f32 %v1260, %v1392
  %v1394 = vpop.f32.mrb[0].mxu0
  %1395 = vmatprep.mubr.f32.mxu0 0.0
  %1396 = vmatmul.mubr.f32.gmra.mrb[0].mxu0 %v1222
  %v1397 = vpop.f32.mrb[0].mxu0
  %v1398 = vadd.f32 %v1260, %v1397
  %v1399 = vpop.f32.mrb[0].mxu0
  %1400 = vmatprep.mubr.f32.mxu0 0.0
  %1401 = vmatmul.mubr.f32.gmra.mrb[0].mxu0 %v1223
  %v1402 = vpop.f32.mrb[0].mxu0
  %v1403 = vadd.f32 %v1260, %v1402
  %v1404 = vpop.f32.mrb[0].mxu0
  %1405 = vmatprep.mubr.f32.mxu0 0.0
  %1406 = vmatmul.mubr.f32.gmra.mrb[0].mxu0 %v1224
  %v1407 = vpop.f32.mrb[0].mxu0
  %v1408 = vadd.f32 %v1260, %v1407
  %v1409 = vpop.f32.mrb[0].mxu0
  %1410 = vmatprep.mubr.f32.mxu0 0.0
  %1411 = vmatmul.mubr.f32.gmra.mrb[0].mxu0 %v1225
  %v1412 = vpop.f32.mrb[0].mxu0
  %v1413 = vadd.f32 %v1260, %v1412
  %v1414 = vpop.f32.mrb[0].mxu0
  %1415 = vmatprep.mubr.f32.mxu0 0.0
  %1416 = vmatmul.mubr.f32.gmra.mrb[0].mxu0 %v1226
  %v1417 = vpop.f32.mrb[0].mxu0
  %v1418 = vadd.f32 %v1260, %v1417
  %v1419 = vpop.f32.mrb[0].mxu0
  %1420 = vmatprep.mubr.f32.mxu0 0.0
  %1421 = vmatmul.mubr.f32.gmra.mrb[0].mxu0 %v1227
  %v1422 = vpop.f32.mrb[0].mxu0
  %v1423 = vadd.f32 %v1260, %v1422
  %v1424 = vpop.f32.mrb[0].mxu0
  %1425 = vmatprep.mubr.f32.mxu0 0.0
  %1426 = vmatmul.mubr.f32.gmra.mrb[0].mxu0 %v1228
  %v1427 = vpop.f32.mrb[0].mxu0
  %v1428 = vadd.f32 %v1260, %v1427
  %v1429 = vpop.f32.mrb[0].mxu0
  %1430 = vmatprep.mubr.f32.mxu0 0.0
  %1431 = vmatmul.mubr.f32.gmra.mrb[0].mxu0 %v1229
  %v1432 = vpop.f32.mrb[0].mxu0
  %v1433 = vadd.f32 %v1260, %v1432
  %v1434 = vpop.f32.mrb[0].mxu0
  %1435 = vmatprep.mubr.f32.mxu0 0.0
  %1436 = vmatmul.mubr.f32.gmra.mrb[0].mxu0 %v1230
  %v1437 = vpop.f32.mrb[0].mxu0
  %v1438 = vadd.f32 %v1260, %v1437
  %v1439 = vpop.f32.mrb[0].mxu0
  %1440 = vmatprep.mubr.f32.mxu0 0.0
  %1441 = vmatmul.mubr.f32.gmra.mrb[0].mxu0 %v1231
  %v1442 = vpop.f32.mrb[0].mxu0
  %v1443 = vadd.f32 %v1260, %v1442
  %v1444 = vpop.f32.mrb[0].mxu0
  %1445 = vmatprep.mubr.f32.mxu0 0.0
  %1446 = vmatmul.mubr.f32.gmra.mrb[0].mxu0 %v1232
  %v1447 = vpop.f32.mrb[0].mxu0
  %v1448 = vadd.f32 %v1260, %v1447
  %v1449 = vpop.f32.mrb[0].mxu0
  %1450 = vmatprep.mubr.f32.mxu0 0.0
  %1451 = vmatmul.mubr.f32.gmra.mrb[0].mxu0 %v1233
  %v1452 = vpop.f32.mrb[0].mxu0
  %v1453 = vadd.f32 %v1260, %v1452
  %v1454 = vpop.f32.mrb[0].mxu0
  %1455 = vmatprep.mubr.f32.mxu0 0.0
  %1456 = vmatmul.mubr.f32.gmra.mrb[0].mxu0 %v1234
  %v1457 = vpop.f32.mrb[0].mxu0
  %v1458 = vadd.f32 %v1260, %v1457
  %v1459 = vpop.f32.mrb[0].mxu0
  %1460 = vmatprep.mubr.f32.mxu0 0.0
  %1461 = vmatmul.mubr.f32.gmra.mrb[0].mxu0 %v1235
  %v1462 = vpop.f32.mrb[0].mxu0
  %v1463 = vadd.f32 %v1260, %v1462
  %v1464 = vpop.f32.mrb[0].mxu0
  %1465 = vmatprep.mubr.f32.mxu0 0.0
  %1466 = vmatmul.mubr.f32.gmra.mrb[0].mxu0 %v1236
  %v1467 = vpop.f32.mrb[0].mxu0
  %v1468 = vadd.f32 %v1260, %v1467
  %v1469 = vpop.f32.mrb[0].mxu0
  %1470 = vmatprep.mubr.f32.mxu0 0.0
  %1471 = vmatmul.mubr.f32.gmra.mrb[0].mxu0 %v1237
  %v1472 = vpop.f32.mrb[0].mxu0
  %v1473 = vadd.f32 %v1260, %v1472
  %v1474 = vpop.f32.mrb[0].mxu0
  %1475 = vmatprep.mubr.f32.mxu0 0.0
  %1476 = vmatmul.mubr.f32.gmra.mrb[0].mxu0 %v1238
  %v1477 = vpop.f32.mrb[0].mxu0
  %v1478 = vadd.f32 %v1260, %v1477
  %v1479 = vpop.f32.mrb[0].mxu0
  %1480 = vmatprep.mubr.f32.mxu0 0.0
  %1481 = vmatmul.mubr.f32.gmra.mrb[0].mxu0 %v1239
  %v1482 = vpop.f32.mrb[0].mxu0
  %v1483 = vadd.f32 %v1260, %v1482
  %v1484 = vpop.f32.mrb[0].mxu0
  %1485 = vdwg.mxu0
  %v1486 = vmax.f32 %v1328, 0.0
  %v1487 = vmax.f32 %v1333, 0.0
  %v1488 = vmax.f32 %v1338, 0.0
  %v1489 = vmax.f32 %v1343, 0.0
  %v1490 = vmax.f32 %v1348, 0.0
  %v1491 = vmax.f32 %v1353, 0.0
  %v1492 = vmax.f32 %v1358, 0.0
  %v1493 = vmax.f32 %v1363, 0.0
  %v1494 = vmax.f32 %v1368, 0.0
  %v1495 = vmax.f32 %v1373, 0.0
  %v1496 = vmax.f32 %v1378, 0.0
  %v1497 = vmax.f32 %v1383, 0.0
  %v1498 = vmax.f32 %v1388, 0.0
  %v1499 = vmax.f32 %v1393, 0.0
  %v1500 = vmax.f32 %v1398, 0.0
  %v1501 = vmax.f32 %v1403, 0.0
  %v1502 = vmax.f32 %v1408, 0.0
  %v1503 = vmax.f32 %v1413, 0.0
  %v1504 = vmax.f32 %v1418, 0.0
  %v1505 = vmax.f32 %v1423, 0.0
  %v1506 = vmax.f32 %v1428, 0.0
  %v1507 = vmax.f32 %v1433, 0.0
  %v1508 = vmax.f32 %v1438, 0.0
  %v1509 = vmax.f32 %v1443, 0.0
  %v1510 = vmax.f32 %v1448, 0.0
  %v1511 = vmax.f32 %v1453, 0.0
  %v1512 = vmax.f32 %v1458, 0.0
  %v1513 = vmax.f32 %v1463, 0.0
  %v1514 = vmax.f32 %v1468, 0.0
  %v1515 = vmax.f32 %v1473, 0.0
  %v1516 = vmax.f32 %v1478, 0.0
  %v1517 = vmax.f32 %v1483, 0.0
  %v1518 = vmax.f32 %v1486, %v1487
  %v1519 = vrot.slane %v1518, 4
  %v1520 = vmax.f32 %v1518, %v1519
  %v1521 = vrot.slane %v1520, 2
  %v1522 = vmax.f32 %v1520, %v1521
  %v1523 = vrot.slane %v1522, 1
  %v1524 = vmax.f32 %v1522, %v1523
  %v1525 = vmax.f32 %v1488, %v1489
  %v1526 = vrot.slane %v1525, 4
  %v1527 = vmax.f32 %v1525, %v1526
  %v1528 = vrot.slane %v1527, 2
  %v1529 = vmax.f32 %v1527, %v1528
  %v1530 = vrot.slane %v1529, 1
  %v1531 = vmax.f32 %v1529, %v1530
  %v1532 = vmax.f32 %v1490, %v1491
  %v1533 = vrot.slane %v1532, 4
  %v1534 = vmax.f32 %v1532, %v1533
  %v1535 = vrot.slane %v1534, 2
  %v1536 = vmax.f32 %v1534, %v1535
  %v1537 = vrot.slane %v1536, 1
  %v1538 = vmax.f32 %v1536, %v1537
  %v1539 = vmax.f32 %v1492, %v1493
  %v1540 = vrot.slane %v1539, 4
  %v1541 = vmax.f32 %v1539, %v1540
  %v1542 = vrot.slane %v1541, 2
  %v1543 = vmax.f32 %v1541, %v1542
  %v1544 = vrot.slane %v1543, 1
  %v1545 = vmax.f32 %v1543, %v1544
  %v1546 = vmax.f32 %v1494, %v1495
  %v1547 = vrot.slane %v1546, 4
  %v1548 = vmax.f32 %v1546, %v1547
  %v1549 = vrot.slane %v1548, 2
  %v1550 = vmax.f32 %v1548, %v1549
  %v1551 = vrot.slane %v1550, 1
  %v1552 = vmax.f32 %v1550, %v1551
  %v1553 = vmax.f32 %v1496, %v1497
  %v1554 = vrot.slane %v1553, 4
  %v1555 = vmax.f32 %v1553, %v1554
  %v1556 = vrot.slane %v1555, 2
  %v1557 = vmax.f32 %v1555, %v1556
  %v1558 = vrot.slane %v1557, 1
  %v1559 = vmax.f32 %v1557, %v1558
  %v1560 = vmax.f32 %v1498, %v1499
  %v1561 = vrot.slane %v1560, 4
  %v1562 = vmax.f32 %v1560, %v1561
  %v1563 = vrot.slane %v1562, 2
  %v1564 = vmax.f32 %v1562, %v1563
  %v1565 = vrot.slane %v1564, 1
  %v1566 = vmax.f32 %v1564, %v1565
  %v1567 = vmax.f32 %v1500, %v1501
  %v1568 = vrot.slane %v1567, 4
  %v1569 = vmax.f32 %v1567, %v1568
  %v1570 = vrot.slane %v1569, 2
  %v1571 = vmax.f32 %v1569, %v1570
  %v1572 = vrot.slane %v1571, 1
  %v1573 = vmax.f32 %v1571, %v1572
  %v1574 = vmax.f32 %v1502, %v1503
  %v1575 = vrot.slane %v1574, 4
  %v1576 = vmax.f32 %v1574, %v1575
  %v1577 = vrot.slane %v1576, 2
  %v1578 = vmax.f32 %v1576, %v1577
  %v1579 = vrot.slane %v1578, 1
  %v1580 = vmax.f32 %v1578, %v1579
  %v1581 = vmax.f32 %v1504, %v1505
  %v1582 = vrot.slane %v1581, 4
  %v1583 = vmax.f32 %v1581, %v1582
  %v1584 = vrot.slane %v1583, 2
  %v1585 = vmax.f32 %v1583, %v1584
  %v1586 = vrot.slane %v1585, 1
  %v1587 = vmax.f32 %v1585, %v1586
  %v1588 = vmax.f32 %v1506, %v1507
  %v1589 = vrot.slane %v1588, 4
  %v1590 = vmax.f32 %v1588, %v1589
  %v1591 = vrot.slane %v1590, 2
  %v1592 = vmax.f32 %v1590, %v1591
  %v1593 = vrot.slane %v1592, 1
  %v1594 = vmax.f32 %v1592, %v1593
  %v1595 = vmax.f32 %v1508, %v1509
  %v1596 = vrot.slane %v1595, 4
  %v1597 = vmax.f32 %v1595, %v1596
  %v1598 = vrot.slane %v1597, 2
  %v1599 = vmax.f32 %v1597, %v1598
  %v1600 = vrot.slane %v1599, 1
  %v1601 = vmax.f32 %v1599, %v1600
  %v1602 = vmax.f32 %v1510, %v1511
  %v1603 = vrot.slane %v1602, 4
  %v1604 = vmax.f32 %v1602, %v1603
  %v1605 = vrot.slane %v1604, 2
  %v1606 = vmax.f32 %v1604, %v1605
  %v1607 = vrot.slane %v1606, 1
  %v1608 = vmax.f32 %v1606, %v1607
  %v1609 = vmax.f32 %v1512, %v1513
  %v1610 = vrot.slane %v1609, 4
  %v1611 = vmax.f32 %v1609, %v1610
  %v1612 = vrot.slane %v1611, 2
  %v1613 = vmax.f32 %v1611, %v1612
  %v1614 = vrot.slane %v1613, 1
  %v1615 = vmax.f32 %v1613, %v1614
  %v1616 = vmax.f32 %v1514, %v1515
  %v1617 = vrot.slane %v1616, 4
  %v1618 = vmax.f32 %v1616, %v1617
  %v1619 = vrot.slane %v1618, 2
  %v1620 = vmax.f32 %v1618, %v1619
  %v1621 = vrot.slane %v1620, 1
  %v1622 = vmax.f32 %v1620, %v1621
  %v1623 = vmax.f32 %v1516, %v1517
  %v1624 = vrot.slane %v1623, 4
  %v1625 = vmax.f32 %v1623, %v1624
  %v1626 = vrot.slane %v1625, 2
  %v1627 = vmax.f32 %v1625, %v1626
  %v1628 = vrot.slane %v1627, 1
  %v1629 = vmax.f32 %v1627, %v1628
  %vm1646 = vcmask 1041409
  %v1647 = vsel %vm1646, %v1531, %v1524
  %vm1648 = vcmask 1042434
  %v1649 = vsel %vm1648, %v1538, %v1647
  %vm1650 = vcmask 1043459
  %v1651 = vsel %vm1650, %v1545, %v1649
  %vm1652 = vcmask 1044484
  %v1653 = vsel %vm1652, %v1552, %v1651
  %vm1654 = vcmask 1045509
  %v1655 = vsel %vm1654, %v1559, %v1653
  %vm1656 = vcmask 1046534
  %v1657 = vsel %vm1656, %v1566, %v1655
  %vm1658 = vcmask 1047559
  %v1659 = vsel %vm1658, %v1573, %v1657
  %v1660 = vsel %vm1646, %v1587, %v1580
  %v1661 = vsel %vm1648, %v1594, %v1660
  %v1662 = vsel %vm1650, %v1601, %v1661
  %v1663 = vsel %vm1652, %v1608, %v1662
  %v1664 = vsel %vm1654, %v1615, %v1663
  %v1665 = vsel %vm1656, %v1622, %v1664
  %v1666 = vsel %vm1658, %v1629, %v1665
  %1669 = vst [vmem:[%s3] sm:$0xff] %v1659
  %1670 = vst [vmem:[%s3 + $0x8] sm:$0xff] %v1666
  // Predicated region
  $region14: #{pointnetlk_forward.1} parent=0 // pred_check
    _
  $region15: #{pointnetlk_forward.1} parent=0 // pred_check_branch
    %1672 = sbr.rel (0) target = $region17
  $region16: #{pointnetlk_forward.1} parent=0 // pred_region
    _
  $region17: #{pointnetlk_forward.1} parent=0 // pred_fallthru
    _
  // Predicated region
  $region18: #{pointnetlk_forward.1} parent=0 // pred_check
    _
  $region19: #{pointnetlk_forward.1} parent=0 // pred_check_branch
    %1674 = sbr.rel (0) target = $region21
  $region20: #{pointnetlk_forward.1} parent=0 // pred_region
    _
  $region21: #{pointnetlk_forward.1} parent=0 // pred_fallthru
    _

</llo_original>
